<compile_context>
chip_gen: v7x
topology: tpu7x:2x2x1
jax: 0.10.0
libtpu: 0.0.40
codegen_flags: <defaults>
</compile_context>

<pallas_src>
import functools

import numpy as np
import jax
import jax.numpy as jnp
from jax import lax
from jax.experimental import pallas as pl
from jax.experimental.pallas import tpu as pltpu

BN_EPS = 1e-5
LEAKY_SLOPE = 0.1


# ----------------------------------------------------------------------------
# Pallas kernels
# ----------------------------------------------------------------------------
def _fused_kernel(p1_ref, row_ref, col_ref, wsc_ref, bsc_ref, w1_ref, b1_ref,
                  w2_ref, b2_ref, y_ref, psum_ref, psq_ref, *,
                  ho, wo, cin, cout):
    """Per-image fused conv1 + shortcut + conv2 + residual + BN partial stats.

    p1_ref : (1, Ho*Wo, K1P) bf16  im2col patches of x (conv1 / shortcut input)
    row/col: (Ho*Wo, 1) int32      output-pixel row / col indices (for masks)
    wsc/w1 : (K1P, Cout|Cin) bf16  shortcut / cnn1 weights (share the patches)
    w2     : (9, Cin, Cout)  bf16  cnn2 weights, one tap per leading index
    y_ref  : (1, Ho*Wo, Cout) bf16 pre-BN output (only HBM intermediate)
    psum/psq: (1, 1, Cout) f32     per-image partial sum / sum-of-squares
    """
    hw = ho * wo
    p1 = p1_ref[0]                                         # (hw, K1P) bf16

    # conv1 and the shortcut conv share one im2col -> two MXU matmuls.
    res = jnp.dot(p1, wsc_ref[...],
                  preferred_element_type=jnp.float32) + bsc_ref[...]
    h1 = jnp.dot(p1, w1_ref[...],
                 preferred_element_type=jnp.float32) + b1_ref[...]

    # conv2 (3x3, stride 1, pad 1) with in-kernel im2col:
    # 9 sublane rolls + border masks + small matmuls accumulated in f32.
    row = row_ref[...]                                     # (hw, 1) int32
    col = col_ref[...]
    acc = jnp.zeros((hw, cout), jnp.float32)
    for t in range(9):
        dy, dx = t // 3 - 1, t % 3 - 1
        off = dy * wo + dx
        shifted = pltpu.roll(h1, shift=(-off) % hw, axis=0) if off else h1
        conds = []
        if dy < 0:
            conds.append(row >= -dy)
        if dy > 0:
            conds.append(row < ho - dy)
        if dx < 0:
            conds.append(col >= -dx)
        if dx > 0:
            conds.append(col < wo - dx)
        if conds:
            valid = functools.reduce(lambda a, b: a & b, conds)
            tap = jnp.where(valid, shifted, 0.0)
        else:
            tap = shifted
        acc = acc + jnp.dot(tap.astype(jnp.bfloat16), w2_ref[t],
                            preferred_element_type=jnp.float32)

    y = acc + b2_ref[...] + res                            # (hw, Cout) f32
    y_ref[0] = y.astype(y_ref.dtype)
    psum_ref[0] = jnp.sum(y, axis=0, keepdims=True)
    psq_ref[0] = jnp.sum(y * y, axis=0, keepdims=True)


def _bn_act_kernel(y_ref, scale_ref, shift_ref, out_ref):
    """y * scale + shift (precomputed per-channel) followed by LeakyReLU."""
    y = y_ref[0].astype(jnp.float32)
    yh = y * scale_ref[...] + shift_ref[...]
    out_ref[0] = jnp.where(yh >= 0, yh, LEAKY_SLOPE * yh).astype(out_ref.dtype)


# ----------------------------------------------------------------------------
# Host-side helpers (layout / im2col / weight packing) — plain JAX
# ----------------------------------------------------------------------------
def _round_up(x, m):
    return (x + m - 1) // m * m


def _im2col_3x3(x_nhwc, stride):
    """3x3, pad=1, given stride.  Returns (N, Ho*Wo, 9*Cin), Ho, Wo."""
    n, h, w, c = x_nhwc.shape
    xpad = jnp.pad(x_nhwc, ((0, 0), (1, 1), (1, 1), (0, 0)))
    ho = (h - 1) // stride + 1
    wo = (w - 1) // stride + 1
    cols = [xpad[:, kh:kh + h, kw:kw + w, :][:, ::stride, ::stride, :]
            for kh in range(3) for kw in range(3)]
    patches = jnp.concatenate(cols, axis=-1)               # (N, Ho, Wo, 9*Cin)
    return patches.reshape(n, ho * wo, 9 * c), ho, wo


def _weight_mat(w):
    """PyTorch (Cout, Cin, 3, 3) -> (9*Cin, Cout), matching im2col order."""
    return jnp.transpose(w, (2, 3, 1, 0)).reshape(9 * w.shape[1], w.shape[0])


def _weight_taps(w):
    """PyTorch (Cout, Cin, 3, 3) -> (9, Cin, Cout), one tap per leading index."""
    return jnp.transpose(w, (2, 3, 1, 0)).reshape(9, w.shape[1], w.shape[0])


def pack_params(params, stride, is_shortcut):
    """One-time weight packing (hoisted out of the forward path)."""
    cin = int(params["w1"].shape[0])
    cout = int(params["w2"].shape[0])
    k1p = _round_up(9 * cin, 16)                           # bf16 sublane pack

    if is_shortcut:
        w_sc = jnp.asarray(params["w_sc"], jnp.float32)
        b_sc = jnp.asarray(params["b_sc"], jnp.float32)
    else:
        # Identity residual: synthetic 3x3 identity kernel so both paths share
        # one fused matmul (residual lands in the f32 MXU accumulator).
        assert cin == cout and stride == 1
        w_id = np.zeros((cout, cin, 3, 3), np.float32)
        w_id[np.arange(cout), np.arange(cin), 1, 1] = 1.0
        w_sc = jnp.asarray(w_id)
        b_sc = jnp.zeros((cout,), jnp.float32)

    def pad_rows(m):
        return jnp.pad(m, ((0, k1p - m.shape[0]), (0, 0)))

    return {
        "stride": stride, "cin": cin, "cout": cout, "k1p": k1p,
        "wsc": pad_rows(_weight_mat(w_sc)).astype(jnp.bfloat16),
        "bsc": b_sc.reshape(1, cout).astype(jnp.float32),
        "w1": pad_rows(_weight_mat(params["w1"])).astype(jnp.bfloat16),
        "b1": params["b1"].reshape(1, cin).astype(jnp.float32),
        "w2": _weight_taps(params["w2"]).astype(jnp.bfloat16),
        "b2": params["b2"].reshape(1, cout).astype(jnp.float32),
        "gamma": params["gamma"].astype(jnp.float32),
        "beta": params["beta"].astype(jnp.float32),
    }


# ----------------------------------------------------------------------------
# Forward pass
# ----------------------------------------------------------------------------
def residual_cnn_forward(x_nchw, packed):
    cin, cout = packed["cin"], packed["cout"]
    stride, k1p = packed["stride"], packed["k1p"]

    x = jnp.transpose(x_nchw, (0, 2, 3, 1)).astype(jnp.float32)  # NCHW->NHWC
    n = x.shape[0]

    # TODO(synk): move this last host-side im2col in-kernel (strided halo DMA).
    p1, ho, wo = _im2col_3x3(x, stride)                    # (N, Ho*Wo, 9*Cin)
    hw = ho * wo
    p1 = jnp.pad(p1, ((0, 0), (0, 0),
                      (0, k1p - p1.shape[-1]))).astype(jnp.bfloat16)
    row_ids = jnp.repeat(jnp.arange(ho, dtype=jnp.int32), wo).reshape(hw, 1)
    col_ids = jnp.tile(jnp.arange(wo, dtype=jnp.int32), ho).reshape(hw, 1)

    y, psum, psq = pl.pallas_call(
        functools.partial(_fused_kernel, ho=ho, wo=wo, cin=cin, cout=cout),
        out_shape=(
            jax.ShapeDtypeStruct((n, hw, cout), jnp.bfloat16),   # pre-BN y
            jax.ShapeDtypeStruct((n, 1, cout), jnp.float32),     # partial sum
            jax.ShapeDtypeStruct((n, 1, cout), jnp.float32),     # partial sumsq
        ),
        grid=(n,),
        in_specs=[
            pl.BlockSpec((1, hw, k1p), lambda i: (i, 0, 0)),
            pl.BlockSpec((hw, 1), lambda i: (0, 0)),
            pl.BlockSpec((hw, 1), lambda i: (0, 0)),
            pl.BlockSpec((k1p, cout), lambda i: (0, 0)),
            pl.BlockSpec((1, cout), lambda i: (0, 0)),
            pl.BlockSpec((k1p, cin), lambda i: (0, 0)),
            pl.BlockSpec((1, cin), lambda i: (0, 0)),
            pl.BlockSpec((9, cin, cout), lambda i: (0, 0, 0)),
            pl.BlockSpec((1, cout), lambda i: (0, 0)),
        ],
        out_specs=(
            pl.BlockSpec((1, hw, cout), lambda i: (i, 0, 0)),
            pl.BlockSpec((1, 1, cout), lambda i: (i, 0, 0)),
            pl.BlockSpec((1, 1, cout), lambda i: (i, 0, 0)),
        ),
        compiler_params=pltpu.CompilerParams(
            dimension_semantics=("parallel",)),
    )(p1, row_ids, col_ids, packed["wsc"], packed["bsc"],
      packed["w1"], packed["b1"], packed["w2"], packed["b2"])

    # ---- tiny cross-image stats reduction + BN scale/shift (plain JAX) -----
    count = n * hw
    mean = jnp.sum(psum, axis=(0, 1)) / count
    var = jnp.maximum(jnp.sum(psq, axis=(0, 1)) / count - mean * mean, 0.0)
    scale = packed["gamma"] * lax.rsqrt(var + BN_EPS)      # (Cout,)
    shift = packed["beta"] - mean * scale

    out = pl.pallas_call(
        _bn_act_kernel,
        out_shape=jax.ShapeDtypeStruct((n, hw, cout), jnp.float32),
        grid=(n,),
        in_specs=[
            pl.BlockSpec((1, hw, cout), lambda i: (i, 0, 0)),
            pl.BlockSpec((1, cout), lambda i: (0, 0)),
            pl.BlockSpec((1, cout), lambda i: (0, 0)),
        ],
        out_specs=pl.BlockSpec((1, hw, cout), lambda i: (i, 0, 0)),
        compiler_params=pltpu.CompilerParams(
            dimension_semantics=("parallel",)),
    )(y, scale.reshape(1, cout), shift.reshape(1, cout))

    out = out.reshape(n, ho, wo, cout)
    return jnp.transpose(out, (0, 3, 1, 2))                # NHWC -> NCHW


# ----------------------------------------------------------------------------
# Pure-JAX reference (same bf16-in / f32-accumulate numerics regime)
# ----------------------------------------------------------------------------
def _ref_conv(x_nhwc, w, b, s):
    y = lax.conv_general_dilated(
        x_nhwc.astype(jnp.bfloat16),
        jnp.transpose(w, (2, 3, 1, 0)).astype(jnp.bfloat16),
        (s, s), ((1, 1), (1, 1)),
        dimension_numbers=("NHWC", "HWIO", "NHWC"),
        preferred_element_type=jnp.float32)
    return y + b[None, None, None, :]


def ref_forward(x_nchw, params, stride, is_shortcut):
    x = jnp.transpose(x_nchw, (0, 2, 3, 1)).astype(jnp.float32)
    if is_shortcut:
        residual = _ref_conv(x, params["w_sc"], params["b_sc"], stride)
    else:
        residual = x
    h = _ref_conv(x, params["w1"], params["b1"], stride)
    h = _ref_conv(h, params["w2"], params["b2"], 1)
    y = h + residual
    mean = jnp.mean(y, axis=(0, 1, 2), keepdims=True)
    var = jnp.mean((y - mean) ** 2, axis=(0, 1, 2), keepdims=True)
    yh = (y - mean) / jnp.sqrt(var + BN_EPS)
    yh = yh * params["gamma"] + params["beta"]
    yh = jnp.where(yh >= 0, yh, LEAKY_SLOPE * yh)
    return jnp.transpose(yh, (0, 3, 1, 2))


# ----------------------------------------------------------------------------
if __name__ == "__main__":
    key = jax.random.PRNGKey(0)
    TOL = dict(atol=2e-2, rtol=2e-2)   # bf16-in / f32-accumulate regime

    # ---- Test 1: shortcut path (cin != cout, stride 2) ----------------------
    N, CIN, COUT, H, W, STRIDE = 2, 4, 8, 16, 16, 2
    is_shortcut = (CIN != COUT) or (STRIDE != 1)
    kx, k1, k2, k3, k4, k5, k6, k7, k8, k9 = jax.random.split(key, 10)
    x = jax.random.normal(kx, (N, CIN, H, W), jnp.float32)
    params = {
        "w1": 0.1 * jax.random.normal(k1, (CIN, CIN, 3, 3), jnp.float32),
        "b1": 0.1 * jax.random.normal(k2, (CIN,), jnp.float32),
        "w2": 0.1 * jax.random.normal(k3, (COUT, CIN, 3, 3), jnp.float32),
        "b2": 0.1 * jax.random.normal(k4, (COUT,), jnp.float32),
        "w_sc": 0.1 * jax.random.normal(k5, (COUT, CIN, 3, 3), jnp.float32),
        "b_sc": 0.1 * jax.random.normal(k6, (COUT,), jnp.float32),
        "gamma": 1.0 + 0.1 * jax.random.normal(k7, (COUT,), jnp.float32),
        "beta": 0.1 * jax.random.normal(k8, (COUT,), jnp.float32),
    }
    packed = pack_params(params, STRIDE, is_shortcut)       # hoisted packing
    fwd = jax.jit(functools.partial(residual_cnn_forward, packed=packed))
    out = jax.block_until_ready(fwd(x))
    ref = jax.block_until_ready(ref_forward(x, params, STRIDE, is_shortcut))
    assert out.shape == (N, COUT, H // STRIDE, W // STRIDE), out.shape
    assert jnp.allclose(out, ref, **TOL), float(jnp.max(jnp.abs(out - ref)))

    # ---- Test 2: identity-residual path (cin == cout, stride 1) -------------
    N2, C2, H2 = 2, 4, 8
    ka, kb, kc, kd, ke, kf, kg = jax.random.split(k9, 7)
    x2 = jax.random.normal(ka, (N2, C2, H2, H2), jnp.float32)
    params2 = {
        "w1": 0.1 * jax.random.normal(kb, (C2, C2, 3, 3), jnp.float32),
        "b1": 0.1 * jax.random.normal(kc, (C2,), jnp.float32),
        "w2": 0.1 * jax.random.normal(kd, (C2, C2, 3, 3), jnp.float32),
        "b2": 0.1 * jax.random.normal(ke, (C2,), jnp.float32),
        "gamma": 1.0 + 0.1 * jax.random.normal(kf, (C2,), jnp.float32),
        "beta": 0.1 * jax.random.normal(kg, (C2,), jnp.float32),
    }
    packed2 = pack_params(params2, 1, False)
    fwd2 = jax.jit(functools.partial(residual_cnn_forward, packed=packed2))
    out2 = jax.block_until_ready(fwd2(x2))
    ref2 = jax.block_until_ready(ref_forward(x2, params2, 1, False))
    assert out2.shape == (N2, C2, H2, H2), out2.shape
    assert jnp.allclose(out2, ref2, **TOL), float(jnp.max(jnp.abs(out2 - ref2)))

    print("KERNEL_OK")
</pallas_src>

<mosaic_0001>
module attributes {stable_mosaic.version = 11 : i64} {
  func.func @_fused_kernel(%arg0: i32, %arg1: memref<1x64x48xbf16, #tpu.memory_space<vmem>>, %arg2: memref<64x1xi32, #tpu.memory_space<vmem>>, %arg3: memref<64x1xi32, #tpu.memory_space<vmem>>, %arg4: memref<48x8xbf16, #tpu.memory_space<vmem>>, %arg5: memref<1x8xf32, #tpu.memory_space<vmem>>, %arg6: memref<48x4xbf16, #tpu.memory_space<vmem>>, %arg7: memref<1x4xf32, #tpu.memory_space<vmem>>, %arg8: memref<9x4x8xbf16, #tpu.memory_space<vmem>>, %arg9: memref<1x8xf32, #tpu.memory_space<vmem>>, %arg10: memref<1x64x8xbf16, #tpu.memory_space<vmem>>, %arg11: memref<1x1x8xf32, #tpu.memory_space<vmem>>, %arg12: memref<1x1x8xf32, #tpu.memory_space<vmem>>) attributes {dimension_semantics = [#tpu.dimension_semantics<parallel>], iteration_bounds = array<i64: 2>, scalar_prefetch = 0 : i64, scratch_operands = 0 : i64, tpu.core_type = #tpu.core_type<tc>, window_params = [{transform_indices = @transform_0, window_bounds = array<i64: 1, 64, 48>}, {pipeline_mode = #tpu.pipeline_mode<synchronous>, transform_indices = @transform_1, window_bounds = array<i64: 64, 1>}, {pipeline_mode = #tpu.pipeline_mode<synchronous>, transform_indices = @transform_2, window_bounds = array<i64: 64, 1>}, {pipeline_mode = #tpu.pipeline_mode<synchronous>, transform_indices = @transform_3, window_bounds = array<i64: 48, 8>}, {pipeline_mode = #tpu.pipeline_mode<synchronous>, transform_indices = @transform_4, window_bounds = array<i64: 1, 8>}, {pipeline_mode = #tpu.pipeline_mode<synchronous>, transform_indices = @transform_5, window_bounds = array<i64: 48, 4>}, {pipeline_mode = #tpu.pipeline_mode<synchronous>, transform_indices = @transform_6, window_bounds = array<i64: 1, 4>}, {pipeline_mode = #tpu.pipeline_mode<synchronous>, transform_indices = @transform_7, window_bounds = array<i64: 9, 4, 8>}, {pipeline_mode = #tpu.pipeline_mode<synchronous>, transform_indices = @transform_8, window_bounds = array<i64: 1, 8>}, {transform_indices = @transform_9, window_bounds = array<i64: 1, 64, 8>}, {transform_indices = @transform_10, window_bounds = array<i64: 1, 1, 8>}, {transform_indices = @transform_11, window_bounds = array<i64: 1, 1, 8>}]} {
    %c0 = arith.constant 0 : index
    %c0_0 = arith.constant 0 : index
    %c0_1 = arith.constant 0 : index
    %0 = vector.load %arg1[%c0, %c0_0, %c0_1] : memref<1x64x48xbf16, #tpu.memory_space<vmem>>, vector<1x64x48xbf16>
    %1 = vector.shape_cast %0 : vector<1x64x48xbf16> to vector<64x48xbf16>
    %c0_2 = arith.constant 0 : index
    %c0_3 = arith.constant 0 : index
    %2 = vector.load %arg4[%c0_2, %c0_3] : memref<48x8xbf16, #tpu.memory_space<vmem>>, vector<48x8xbf16>
    %cst = arith.constant dense<0.000000e+00> : vector<64x8xf32>
    %3 = tpu.matmul %1, %2, %cst {dimension_numbers = #tpu.dot_dimension_numbers<[1], [0], [0], [1], [0, 0, 1, 1], [], []>} : vector<64x48xbf16>, vector<48x8xbf16>, vector<64x8xf32> -> vector<64x8xf32>
    %c0_4 = arith.constant 0 : index
    %c0_5 = arith.constant 0 : index
    %4 = vector.load %arg5[%c0_4, %c0_5] : memref<1x8xf32, #tpu.memory_space<vmem>>, vector<1x8xf32>
    %5 = vector.broadcast %4 : vector<1x8xf32> to vector<64x8xf32>
    %6 = arith.addf %3, %5 : vector<64x8xf32>
    %c0_6 = arith.constant 0 : index
    %c0_7 = arith.constant 0 : index
    %7 = vector.load %arg6[%c0_6, %c0_7] : memref<48x4xbf16, #tpu.memory_space<vmem>>, vector<48x4xbf16>
    %cst_8 = arith.constant dense<0.000000e+00> : vector<64x4xf32>
    %8 = tpu.matmul %1, %7, %cst_8 {dimension_numbers = #tpu.dot_dimension_numbers<[1], [0], [0], [1], [0, 0, 1, 1], [], []>} : vector<64x48xbf16>, vector<48x4xbf16>, vector<64x4xf32> -> vector<64x4xf32>
    %c0_9 = arith.constant 0 : index
    %c0_10 = arith.constant 0 : index
    %9 = vector.load %arg7[%c0_9, %c0_10] : memref<1x4xf32, #tpu.memory_space<vmem>>, vector<1x4xf32>
    %10 = vector.broadcast %9 : vector<1x4xf32> to vector<64x4xf32>
    %11 = arith.addf %8, %10 : vector<64x4xf32>
    %c0_11 = arith.constant 0 : index
    %c0_12 = arith.constant 0 : index
    %12 = vector.load %arg2[%c0_11, %c0_12] : memref<64x1xi32, #tpu.memory_space<vmem>>, vector<64x1xi32>
    %c0_13 = arith.constant 0 : index
    %c0_14 = arith.constant 0 : index
    %13 = vector.load %arg3[%c0_13, %c0_14] : memref<64x1xi32, #tpu.memory_space<vmem>>, vector<64x1xi32>
    %cst_15 = arith.constant 0.000000e+00 : f32
    %14 = vector.broadcast %cst_15 : f32 to vector<64x8xf32>
    %c9_i32 = arith.constant 9 : i32
    %15 = tpu.dynamic_rotate %11 by %c9_i32 dim 0 : vector<64x4xf32>, i32 -> vector<64x4xf32>
    %c1_i32 = arith.constant 1 : i32
    %16 = vector.broadcast %c1_i32 : i32 to vector<64x1xi32>
    %17 = arith.cmpi sge, %12, %16 : vector<64x1xi32>
    %c1_i32_16 = arith.constant 1 : i32
    %18 = vector.broadcast %c1_i32_16 : i32 to vector<64x1xi32>
    %19 = arith.cmpi sge, %13, %18 : vector<64x1xi32>
    %20 = arith.andi %17, %19 : vector<64x1xi1>
    %cst_17 = arith.constant 0.000000e+00 : f32
    %21 = vector.shape_cast %20 : vector<64x1xi1> to vector<64x1xi1>
    %22 = vector.broadcast %21 : vector<64x1xi1> to vector<64x4xi1>
    %23 = vector.broadcast %cst_17 : f32 to vector<64x4xf32>
    %24 = arith.select %22, %15, %23 : vector<64x4xi1>, vector<64x4xf32>
    %25 = arith.truncf %24 : vector<64x4xf32> to vector<64x4xbf16>
    %c0_18 = arith.constant 0 : index
    %c0_19 = arith.constant 0 : index
    %c0_20 = arith.constant 0 : index
    %26 = vector.load %arg8[%c0_18, %c0_19, %c0_20] : memref<9x4x8xbf16, #tpu.memory_space<vmem>>, vector<1x4x8xbf16>
    %27 = vector.shape_cast %26 : vector<1x4x8xbf16> to vector<4x8xbf16>
    %cst_21 = arith.constant dense<0.000000e+00> : vector<64x8xf32>
    %28 = tpu.matmul %25, %27, %cst_21 {dimension_numbers = #tpu.dot_dimension_numbers<[1], [0], [0], [1], [0, 0, 1, 1], [], []>} : vector<64x4xbf16>, vector<4x8xbf16>, vector<64x8xf32> -> vector<64x8xf32>
    %29 = arith.addf %14, %28 : vector<64x8xf32>
    %c8_i32 = arith.constant 8 : i32
    %30 = tpu.dynamic_rotate %11 by %c8_i32 dim 0 : vector<64x4xf32>, i32 -> vector<64x4xf32>
    %c1_i32_22 = arith.constant 1 : i32
    %31 = vector.broadcast %c1_i32_22 : i32 to vector<64x1xi32>
    %32 = arith.cmpi sge, %12, %31 : vector<64x1xi32>
    %cst_23 = arith.constant 0.000000e+00 : f32
    %33 = vector.shape_cast %32 : vector<64x1xi1> to vector<64x1xi1>
    %34 = vector.broadcast %33 : vector<64x1xi1> to vector<64x4xi1>
    %35 = vector.broadcast %cst_23 : f32 to vector<64x4xf32>
    %36 = arith.select %34, %30, %35 : vector<64x4xi1>, vector<64x4xf32>
    %37 = arith.truncf %36 : vector<64x4xf32> to vector<64x4xbf16>
    %c1 = arith.constant 1 : index
    %c0_24 = arith.constant 0 : index
    %c0_25 = arith.constant 0 : index
    %38 = vector.load %arg8[%c1, %c0_24, %c0_25] : memref<9x4x8xbf16, #tpu.memory_space<vmem>>, vector<1x4x8xbf16>
    %39 = vector.shape_cast %38 : vector<1x4x8xbf16> to vector<4x8xbf16>
    %cst_26 = arith.constant dense<0.000000e+00> : vector<64x8xf32>
    %40 = tpu.matmul %37, %39, %cst_26 {dimension_numbers = #tpu.dot_dimension_numbers<[1], [0], [0], [1], [0, 0, 1, 1], [], []>} : vector<64x4xbf16>, vector<4x8xbf16>, vector<64x8xf32> -> vector<64x8xf32>
    %41 = arith.addf %29, %40 : vector<64x8xf32>
    %c7_i32 = arith.constant 7 : i32
    %42 = tpu.dynamic_rotate %11 by %c7_i32 dim 0 : vector<64x4xf32>, i32 -> vector<64x4xf32>
    %c1_i32_27 = arith.constant 1 : i32
    %43 = vector.broadcast %c1_i32_27 : i32 to vector<64x1xi32>
    %44 = arith.cmpi sge, %12, %43 : vector<64x1xi32>
    %c7_i32_28 = arith.constant 7 : i32
    %45 = vector.broadcast %c7_i32_28 : i32 to vector<64x1xi32>
    %46 = arith.cmpi slt, %13, %45 : vector<64x1xi32>
    %47 = arith.andi %44, %46 : vector<64x1xi1>
    %cst_29 = arith.constant 0.000000e+00 : f32
    %48 = vector.shape_cast %47 : vector<64x1xi1> to vector<64x1xi1>
    %49 = vector.broadcast %48 : vector<64x1xi1> to vector<64x4xi1>
    %50 = vector.broadcast %cst_29 : f32 to vector<64x4xf32>
    %51 = arith.select %49, %42, %50 : vector<64x4xi1>, vector<64x4xf32>
    %52 = arith.truncf %51 : vector<64x4xf32> to vector<64x4xbf16>
    %c2 = arith.constant 2 : index
    %c0_30 = arith.constant 0 : index
    %c0_31 = arith.constant 0 : index
    %53 = vector.load %arg8[%c2, %c0_30, %c0_31] : memref<9x4x8xbf16, #tpu.memory_space<vmem>>, vector<1x4x8xbf16>
    %54 = vector.shape_cast %53 : vector<1x4x8xbf16> to vector<4x8xbf16>
    %cst_32 = arith.constant dense<0.000000e+00> : vector<64x8xf32>
    %55 = tpu.matmul %52, %54, %cst_32 {dimension_numbers = #tpu.dot_dimension_numbers<[1], [0], [0], [1], [0, 0, 1, 1], [], []>} : vector<64x4xbf16>, vector<4x8xbf16>, vector<64x8xf32> -> vector<64x8xf32>
    %56 = arith.addf %41, %55 : vector<64x8xf32>
    %c1_i32_33 = arith.constant 1 : i32
    %57 = tpu.dynamic_rotate %11 by %c1_i32_33 dim 0 : vector<64x4xf32>, i32 -> vector<64x4xf32>
    %c1_i32_34 = arith.constant 1 : i32
    %58 = vector.broadcast %c1_i32_34 : i32 to vector<64x1xi32>
    %59 = arith.cmpi sge, %13, %58 : vector<64x1xi32>
    %cst_35 = arith.constant 0.000000e+00 : f32
    %60 = vector.shape_cast %59 : vector<64x1xi1> to vector<64x1xi1>
    %61 = vector.broadcast %60 : vector<64x1xi1> to vector<64x4xi1>
    %62 = vector.broadcast %cst_35 : f32 to vector<64x4xf32>
    %63 = arith.select %61, %57, %62 : vector<64x4xi1>, vector<64x4xf32>
    %64 = arith.truncf %63 : vector<64x4xf32> to vector<64x4xbf16>
    %c3 = arith.constant 3 : index
    %c0_36 = arith.constant 0 : index
    %c0_37 = arith.constant 0 : index
    %65 = vector.load %arg8[%c3, %c0_36, %c0_37] : memref<9x4x8xbf16, #tpu.memory_space<vmem>>, vector<1x4x8xbf16>
    %66 = vector.shape_cast %65 : vector<1x4x8xbf16> to vector<4x8xbf16>
    %cst_38 = arith.constant dense<0.000000e+00> : vector<64x8xf32>
    %67 = tpu.matmul %64, %66, %cst_38 {dimension_numbers = #tpu.dot_dimension_numbers<[1], [0], [0], [1], [0, 0, 1, 1], [], []>} : vector<64x4xbf16>, vector<4x8xbf16>, vector<64x8xf32> -> vector<64x8xf32>
    %68 = arith.addf %56, %67 : vector<64x8xf32>
    %69 = arith.truncf %11 : vector<64x4xf32> to vector<64x4xbf16>
    %c4 = arith.constant 4 : index
    %c0_39 = arith.constant 0 : index
    %c0_40 = arith.constant 0 : index
    %70 = vector.load %arg8[%c4, %c0_39, %c0_40] : memref<9x4x8xbf16, #tpu.memory_space<vmem>>, vector<1x4x8xbf16>
    %71 = vector.shape_cast %70 : vector<1x4x8xbf16> to vector<4x8xbf16>
    %cst_41 = arith.constant dense<0.000000e+00> : vector<64x8xf32>
    %72 = tpu.matmul %69, %71, %cst_41 {dimension_numbers = #tpu.dot_dimension_numbers<[1], [0], [0], [1], [0, 0, 1, 1], [], []>} : vector<64x4xbf16>, vector<4x8xbf16>, vector<64x8xf32> -> vector<64x8xf32>
    %73 = arith.addf %68, %72 : vector<64x8xf32>
    %c63_i32 = arith.constant 63 : i32
    %74 = tpu.dynamic_rotate %11 by %c63_i32 dim 0 : vector<64x4xf32>, i32 -> vector<64x4xf32>
    %c7_i32_42 = arith.constant 7 : i32
    %75 = vector.broadcast %c7_i32_42 : i32 to vector<64x1xi32>
    %76 = arith.cmpi slt, %13, %75 : vector<64x1xi32>
    %cst_43 = arith.constant 0.000000e+00 : f32
    %77 = vector.shape_cast %76 : vector<64x1xi1> to vector<64x1xi1>
    %78 = vector.broadcast %77 : vector<64x1xi1> to vector<64x4xi1>
    %79 = vector.broadcast %cst_43 : f32 to vector<64x4xf32>
    %80 = arith.select %78, %74, %79 : vector<64x4xi1>, vector<64x4xf32>
    %81 = arith.truncf %80 : vector<64x4xf32> to vector<64x4xbf16>
    %c5 = arith.constant 5 : index
    %c0_44 = arith.constant 0 : index
    %c0_45 = arith.constant 0 : index
    %82 = vector.load %arg8[%c5, %c0_44, %c0_45] : memref<9x4x8xbf16, #tpu.memory_space<vmem>>, vector<1x4x8xbf16>
    %83 = vector.shape_cast %82 : vector<1x4x8xbf16> to vector<4x8xbf16>
    %cst_46 = arith.constant dense<0.000000e+00> : vector<64x8xf32>
    %84 = tpu.matmul %81, %83, %cst_46 {dimension_numbers = #tpu.dot_dimension_numbers<[1], [0], [0], [1], [0, 0, 1, 1], [], []>} : vector<64x4xbf16>, vector<4x8xbf16>, vector<64x8xf32> -> vector<64x8xf32>
    %85 = arith.addf %73, %84 : vector<64x8xf32>
    %c57_i32 = arith.constant 57 : i32
    %86 = tpu.dynamic_rotate %11 by %c57_i32 dim 0 : vector<64x4xf32>, i32 -> vector<64x4xf32>
    %c7_i32_47 = arith.constant 7 : i32
    %87 = vector.broadcast %c7_i32_47 : i32 to vector<64x1xi32>
    %88 = arith.cmpi slt, %12, %87 : vector<64x1xi32>
    %c1_i32_48 = arith.constant 1 : i32
    %89 = vector.broadcast %c1_i32_48 : i32 to vector<64x1xi32>
    %90 = arith.cmpi sge, %13, %89 : vector<64x1xi32>
    %91 = arith.andi %88, %90 : vector<64x1xi1>
    %cst_49 = arith.constant 0.000000e+00 : f32
    %92 = vector.shape_cast %91 : vector<64x1xi1> to vector<64x1xi1>
    %93 = vector.broadcast %92 : vector<64x1xi1> to vector<64x4xi1>
    %94 = vector.broadcast %cst_49 : f32 to vector<64x4xf32>
    %95 = arith.select %93, %86, %94 : vector<64x4xi1>, vector<64x4xf32>
    %96 = arith.truncf %95 : vector<64x4xf32> to vector<64x4xbf16>
    %c6 = arith.constant 6 : index
    %c0_50 = arith.constant 0 : index
    %c0_51 = arith.constant 0 : index
    %97 = vector.load %arg8[%c6, %c0_50, %c0_51] : memref<9x4x8xbf16, #tpu.memory_space<vmem>>, vector<1x4x8xbf16>
    %98 = vector.shape_cast %97 : vector<1x4x8xbf16> to vector<4x8xbf16>
    %cst_52 = arith.constant dense<0.000000e+00> : vector<64x8xf32>
    %99 = tpu.matmul %96, %98, %cst_52 {dimension_numbers = #tpu.dot_dimension_numbers<[1], [0], [0], [1], [0, 0, 1, 1], [], []>} : vector<64x4xbf16>, vector<4x8xbf16>, vector<64x8xf32> -> vector<64x8xf32>
    %100 = arith.addf %85, %99 : vector<64x8xf32>
    %c56_i32 = arith.constant 56 : i32
    %101 = tpu.dynamic_rotate %11 by %c56_i32 dim 0 : vector<64x4xf32>, i32 -> vector<64x4xf32>
    %c7_i32_53 = arith.constant 7 : i32
    %102 = vector.broadcast %c7_i32_53 : i32 to vector<64x1xi32>
    %103 = arith.cmpi slt, %12, %102 : vector<64x1xi32>
    %cst_54 = arith.constant 0.000000e+00 : f32
    %104 = vector.shape_cast %103 : vector<64x1xi1> to vector<64x1xi1>
    %105 = vector.broadcast %104 : vector<64x1xi1> to vector<64x4xi1>
    %106 = vector.broadcast %cst_54 : f32 to vector<64x4xf32>
    %107 = arith.select %105, %101, %106 : vector<64x4xi1>, vector<64x4xf32>
    %108 = arith.truncf %107 : vector<64x4xf32> to vector<64x4xbf16>
    %c7 = arith.constant 7 : index
    %c0_55 = arith.constant 0 : index
    %c0_56 = arith.constant 0 : index
    %109 = vector.load %arg8[%c7, %c0_55, %c0_56] : memref<9x4x8xbf16, #tpu.memory_space<vmem>>, vector<1x4x8xbf16>
    %110 = vector.shape_cast %109 : vector<1x4x8xbf16> to vector<4x8xbf16>
    %cst_57 = arith.constant dense<0.000000e+00> : vector<64x8xf32>
    %111 = tpu.matmul %108, %110, %cst_57 {dimension_numbers = #tpu.dot_dimension_numbers<[1], [0], [0], [1], [0, 0, 1, 1], [], []>} : vector<64x4xbf16>, vector<4x8xbf16>, vector<64x8xf32> -> vector<64x8xf32>
    %112 = arith.addf %100, %111 : vector<64x8xf32>
    %c55_i32 = arith.constant 55 : i32
    %113 = tpu.dynamic_rotate %11 by %c55_i32 dim 0 : vector<64x4xf32>, i32 -> vector<64x4xf32>
    %c7_i32_58 = arith.constant 7 : i32
    %114 = vector.broadcast %c7_i32_58 : i32 to vector<64x1xi32>
    %115 = arith.cmpi slt, %12, %114 : vector<64x1xi32>
    %c7_i32_59 = arith.constant 7 : i32
    %116 = vector.broadcast %c7_i32_59 : i32 to vector<64x1xi32>
    %117 = arith.cmpi slt, %13, %116 : vector<64x1xi32>
    %118 = arith.andi %115, %117 : vector<64x1xi1>
    %cst_60 = arith.constant 0.000000e+00 : f32
    %119 = vector.shape_cast %118 : vector<64x1xi1> to vector<64x1xi1>
    %120 = vector.broadcast %119 : vector<64x1xi1> to vector<64x4xi1>
    %121 = vector.broadcast %cst_60 : f32 to vector<64x4xf32>
    %122 = arith.select %120, %113, %121 : vector<64x4xi1>, vector<64x4xf32>
    %123 = arith.truncf %122 : vector<64x4xf32> to vector<64x4xbf16>
    %c8 = arith.constant 8 : index
    %c0_61 = arith.constant 0 : index
    %c0_62 = arith.constant 0 : index
    %124 = vector.load %arg8[%c8, %c0_61, %c0_62] : memref<9x4x8xbf16, #tpu.memory_space<vmem>>, vector<1x4x8xbf16>
    %125 = vector.shape_cast %124 : vector<1x4x8xbf16> to vector<4x8xbf16>
    %cst_63 = arith.constant dense<0.000000e+00> : vector<64x8xf32>
    %126 = tpu.matmul %123, %125, %cst_63 {dimension_numbers = #tpu.dot_dimension_numbers<[1], [0], [0], [1], [0, 0, 1, 1], [], []>} : vector<64x4xbf16>, vector<4x8xbf16>, vector<64x8xf32> -> vector<64x8xf32>
    %127 = arith.addf %112, %126 : vector<64x8xf32>
    %c0_64 = arith.constant 0 : index
    %c0_65 = arith.constant 0 : index
    %128 = vector.load %arg9[%c0_64, %c0_65] : memref<1x8xf32, #tpu.memory_space<vmem>>, vector<1x8xf32>
    %129 = vector.broadcast %128 : vector<1x8xf32> to vector<64x8xf32>
    %130 = arith.addf %127, %129 : vector<64x8xf32>
    %131 = arith.addf %130, %6 : vector<64x8xf32>
    %132 = arith.truncf %131 : vector<64x8xf32> to vector<64x8xbf16>
    %c0_66 = arith.constant 0 : index
    %c0_67 = arith.constant 0 : index
    %c0_68 = arith.constant 0 : index
    %133 = vector.load %arg10[%c0_66, %c0_67, %c0_68] : memref<1x64x8xbf16, #tpu.memory_space<vmem>>, vector<1x64x8xbf16>
    %134 = vector.shape_cast %133 : vector<1x64x8xbf16> to vector<64x8xbf16>
    %135 = vector.shape_cast %132 : vector<64x8xbf16> to vector<1x64x8xbf16>
    tpu.vector_store %arg10[%c0_66, %c0_67, %c0_68], %135 {strides = array<i32>} : memref<1x64x8xbf16, #tpu.memory_space<vmem>>, vector<1x64x8xbf16>,
    %cst_69 = arith.constant dense<0.000000e+00> : vector<8xf32>
    %136 = vector.multi_reduction <add>, %131, %cst_69 [0] : vector<64x8xf32> to vector<8xf32>
    %137 = vector.shape_cast %136 : vector<8xf32> to vector<1x8xf32>
    %c0_70 = arith.constant 0 : index
    %c0_71 = arith.constant 0 : index
    %c0_72 = arith.constant 0 : index
    %138 = vector.load %arg11[%c0_70, %c0_71, %c0_72] : memref<1x1x8xf32, #tpu.memory_space<vmem>>, vector<1x1x8xf32>
    %139 = vector.shape_cast %138 : vector<1x1x8xf32> to vector<1x8xf32>
    %140 = vector.shape_cast %137 : vector<1x8xf32> to vector<1x1x8xf32>
    tpu.vector_store %arg11[%c0_70, %c0_71, %c0_72], %140 {strides = array<i32>} : memref<1x1x8xf32, #tpu.memory_space<vmem>>, vector<1x1x8xf32>,
    %141 = arith.mulf %131, %131 : vector<64x8xf32>
    %cst_73 = arith.constant dense<0.000000e+00> : vector<8xf32>
    %142 = vector.multi_reduction <add>, %141, %cst_73 [0] : vector<64x8xf32> to vector<8xf32>
    %143 = vector.shape_cast %142 : vector<8xf32> to vector<1x8xf32>
    %c0_74 = arith.constant 0 : index
    %c0_75 = arith.constant 0 : index
    %c0_76 = arith.constant 0 : index
    %144 = vector.load %arg12[%c0_74, %c0_75, %c0_76] : memref<1x1x8xf32, #tpu.memory_space<vmem>>, vector<1x1x8xf32>
    %145 = vector.shape_cast %144 : vector<1x1x8xf32> to vector<1x8xf32>
    %146 = vector.shape_cast %143 : vector<1x8xf32> to vector<1x1x8xf32>
    tpu.vector_store %arg12[%c0_74, %c0_75, %c0_76], %146 {strides = array<i32>} : memref<1x1x8xf32, #tpu.memory_space<vmem>>, vector<1x1x8xf32>,
    return
  }
  func.func @transform_0(%arg0: i32) -> (i32, i32, i32) {
    %c0_i32 = arith.constant 0 : i32
    %c0_i32_0 = arith.constant 0 : i32
    %c0_i32_1 = arith.constant 0 : i32
    return %arg0, %c0_i32, %c0_i32_0 : i32, i32, i32
  }
  func.func @transform_1(%arg0: i32) -> (i32, i32) {
    %c0_i32 = arith.constant 0 : i32
    %c0_i32_0 = arith.constant 0 : i32
    %c0_i32_1 = arith.constant 0 : i32
    return %c0_i32, %c0_i32_0 : i32, i32
  }
  func.func @transform_2(%arg0: i32) -> (i32, i32) {
    %c0_i32 = arith.constant 0 : i32
    %c0_i32_0 = arith.constant 0 : i32
    %c0_i32_1 = arith.constant 0 : i32
    return %c0_i32, %c0_i32_0 : i32, i32
  }
  func.func @transform_3(%arg0: i32) -> (i32, i32) {
    %c0_i32 = arith.constant 0 : i32
    %c0_i32_0 = arith.constant 0 : i32
    %c0_i32_1 = arith.constant 0 : i32
    return %c0_i32, %c0_i32_0 : i32, i32
  }
  func.func @transform_4(%arg0: i32) -> (i32, i32) {
    %c0_i32 = arith.constant 0 : i32
    %c0_i32_0 = arith.constant 0 : i32
    %c0_i32_1 = arith.constant 0 : i32
    return %c0_i32, %c0_i32_0 : i32, i32
  }
  func.func @transform_5(%arg0: i32) -> (i32, i32) {
    %c0_i32 = arith.constant 0 : i32
    %c0_i32_0 = arith.constant 0 : i32
    %c0_i32_1 = arith.constant 0 : i32
    return %c0_i32, %c0_i32_0 : i32, i32
  }
  func.func @transform_6(%arg0: i32) -> (i32, i32) {
    %c0_i32 = arith.constant 0 : i32
    %c0_i32_0 = arith.constant 0 : i32
    %c0_i32_1 = arith.constant 0 : i32
    return %c0_i32, %c0_i32_0 : i32, i32
  }
  func.func @transform_7(%arg0: i32) -> (i32, i32, i32) {
    %c0_i32 = arith.constant 0 : i32
    %c0_i32_0 = arith.constant 0 : i32
    %c0_i32_1 = arith.constant 0 : i32
    %c0_i32_2 = arith.constant 0 : i32
    return %c0_i32, %c0_i32_0, %c0_i32_1 : i32, i32, i32
  }
  func.func @transform_8(%arg0: i32) -> (i32, i32) {
    %c0_i32 = arith.constant 0 : i32
    %c0_i32_0 = arith.constant 0 : i32
    %c0_i32_1 = arith.constant 0 : i32
    return %c0_i32, %c0_i32_0 : i32, i32
  }
  func.func @transform_9(%arg0: i32) -> (i32, i32, i32) {
    %c0_i32 = arith.constant 0 : i32
    %c0_i32_0 = arith.constant 0 : i32
    %c0_i32_1 = arith.constant 0 : i32
    return %arg0, %c0_i32, %c0_i32_0 : i32, i32, i32
  }
  func.func @transform_10(%arg0: i32) -> (i32, i32, i32) {
    %c0_i32 = arith.constant 0 : i32
    %c0_i32_0 = arith.constant 0 : i32
    %c0_i32_1 = arith.constant 0 : i32
    return %arg0, %c0_i32, %c0_i32_0 : i32, i32, i32
  }
  func.func @transform_11(%arg0: i32) -> (i32, i32, i32) {
    %c0_i32 = arith.constant 0 : i32
    %c0_i32_0 = arith.constant 0 : i32
    %c0_i32_1 = arith.constant 0 : i32
    return %arg0, %c0_i32, %c0_i32_0 : i32, i32, i32
  }
}

module attributes {stable_mosaic.version = 11 : i64} {
  func.func @_bn_act_kernel(%arg0: i32, %arg1: memref<1x64x8xbf16, #tpu.memory_space<vmem>>, %arg2: memref<1x8xf32, #tpu.memory_space<vmem>>, %arg3: memref<1x8xf32, #tpu.memory_space<vmem>>, %arg4: memref<1x64x8xf32, #tpu.memory_space<vmem>>) attributes {dimension_semantics = [#tpu.dimension_semantics<parallel>], iteration_bounds = array<i64: 2>, scalar_prefetch = 0 : i64, scratch_operands = 0 : i64, tpu.core_type = #tpu.core_type<tc>, window_params = [{transform_indices = @transform_0, window_bounds = array<i64: 1, 64, 8>}, {pipeline_mode = #tpu.pipeline_mode<synchronous>, transform_indices = @transform_1, window_bounds = array<i64: 1, 8>}, {pipeline_mode = #tpu.pipeline_mode<synchronous>, transform_indices = @transform_2, window_bounds = array<i64: 1, 8>}, {transform_indices = @transform_3, window_bounds = array<i64: 1, 64, 8>}]} {
    %c0 = arith.constant 0 : index
    %c0_0 = arith.constant 0 : index
    %c0_1 = arith.constant 0 : index
    %0 = vector.load %arg1[%c0, %c0_0, %c0_1] : memref<1x64x8xbf16, #tpu.memory_space<vmem>>, vector<1x64x8xbf16>
    %1 = vector.shape_cast %0 : vector<1x64x8xbf16> to vector<64x8xbf16>
    %2 = arith.extf %1 : vector<64x8xbf16> to vector<64x8xf32>
    %c0_2 = arith.constant 0 : index
    %c0_3 = arith.constant 0 : index
    %3 = vector.load %arg2[%c0_2, %c0_3] : memref<1x8xf32, #tpu.memory_space<vmem>>, vector<1x8xf32>
    %4 = vector.broadcast %3 : vector<1x8xf32> to vector<64x8xf32>
    %5 = arith.mulf %2, %4 : vector<64x8xf32>
    %c0_4 = arith.constant 0 : index
    %c0_5 = arith.constant 0 : index
    %6 = vector.load %arg3[%c0_4, %c0_5] : memref<1x8xf32, #tpu.memory_space<vmem>>, vector<1x8xf32>
    %7 = vector.broadcast %6 : vector<1x8xf32> to vector<64x8xf32>
    %8 = arith.addf %5, %7 : vector<64x8xf32>
    %cst = arith.constant 0.000000e+00 : f32
    %9 = vector.broadcast %cst : f32 to vector<64x8xf32>
    %10 = arith.cmpf oge, %8, %9 : vector<64x8xf32>
    %cst_6 = arith.constant 1.000000e-01 : f32
    %11 = vector.broadcast %cst_6 : f32 to vector<64x8xf32>
    %12 = arith.mulf %11, %8 : vector<64x8xf32>
    %13 = arith.select %10, %8, %12 : vector<64x8xi1>, vector<64x8xf32>
    %c0_7 = arith.constant 0 : index
    %c0_8 = arith.constant 0 : index
    %c0_9 = arith.constant 0 : index
    %14 = vector.load %arg4[%c0_7, %c0_8, %c0_9] : memref<1x64x8xf32, #tpu.memory_space<vmem>>, vector<1x64x8xf32>
    %15 = vector.shape_cast %14 : vector<1x64x8xf32> to vector<64x8xf32>
    %16 = vector.shape_cast %13 : vector<64x8xf32> to vector<1x64x8xf32>
    tpu.vector_store %arg4[%c0_7, %c0_8, %c0_9], %16 {strides = array<i32>} : memref<1x64x8xf32, #tpu.memory_space<vmem>>, vector<1x64x8xf32>,
    return
  }
  func.func @transform_0(%arg0: i32) -> (i32, i32, i32) {
    %c0_i32 = arith.constant 0 : i32
    %c0_i32_0 = arith.constant 0 : i32
    %c0_i32_1 = arith.constant 0 : i32
    return %arg0, %c0_i32, %c0_i32_0 : i32, i32, i32
  }
  func.func @transform_1(%arg0: i32) -> (i32, i32) {
    %c0_i32 = arith.constant 0 : i32
    %c0_i32_0 = arith.constant 0 : i32
    %c0_i32_1 = arith.constant 0 : i32
    return %c0_i32, %c0_i32_0 : i32, i32
  }
  func.func @transform_2(%arg0: i32) -> (i32, i32) {
    %c0_i32 = arith.constant 0 : i32
    %c0_i32_0 = arith.constant 0 : i32
    %c0_i32_1 = arith.constant 0 : i32
    return %c0_i32, %c0_i32_0 : i32, i32
  }
  func.func @transform_3(%arg0: i32) -> (i32, i32, i32) {
    %c0_i32 = arith.constant 0 : i32
    %c0_i32_0 = arith.constant 0 : i32
    %c0_i32_1 = arith.constant 0 : i32
    return %arg0, %c0_i32, %c0_i32_0 : i32, i32, i32
  }
}

</mosaic_0001>

<llo_original>
// kernel: residual_cnn_forward.3
$region0: #{residual_cnn_forward.3}
  #allocation0 [shape = 'u32[]', space=smem, size = 0x4, offset = 0x4, fixed_abs, tag = 'smem constant byte address 0x4 - core index']
  #allocation1 [shape = 'u32[144,128]{1,0:T(1,128)}', space=vmem, size = 0x12000, scoped, tag = 'internal scratch']
  %s0 = inlined_call_operand.vmem [shape: bf16[2,64,8], index: 0, kind: input, shape index: {}]
  %s1 = inlined_call_operand.vmem [shape: f32[1,8], index: 1, kind: input, shape index: {}]
  %s2 = inlined_call_operand.vmem [shape: f32[1,8], index: 2, kind: input, shape index: {}]
  %s3 = inlined_call_operand.vmem [shape: f32[2,64,8], index: 3, kind: output, shape index: {}]
  %s4 = sld [smem:[#allocation0]]
  $region45: #{residual_cnn_forward.3} parent=0
    _
  %s6 = ssub.s32 1, %s4
  %s7 = scalar_select 0, %s6, %s4
  loop: start=0, step=1, limit=4
  $region2: #{residual_cnn_forward.3} parent=0 // loop_pre_header
    _
  $region3: #{residual_cnn_forward.3} parent=0 // loop_header
    %s9 = sphi 0, %s13
    %p10 = scmp.ge.s32.totalorder %s9, 4
    %s19 = sphi 0, %s21
    %s22 = sphi 0, %s19
    %s23 = sphi 0, %s22
    %s39 = sphi 0, %s23
    %s43 = sphi 0, %s43
    %s45 = sphi 0, %s43
    %s46 = sphi 0, %s45
    %s60 = sphi 0, %s46
    %s64 = sphi 0, %s64
    %s66 = sphi 0, %s64
    %s67 = sphi 0, %s66
    %s81 = sphi 0, %s67
    %s87 = sphi 0, %s89
    %s90 = sphi 0, %s87
    %s91 = sphi 0, %s90
    %s107 = sphi 0, %s91
  $region4: #{residual_cnn_forward.3} parent=0 // loop_header_branch
    %12 = sbr.rel (%p10) target = $region8
  $region5: #{residual_cnn_forward.3} parent=0 // loop_body
    %s14 = ssub.s32 %s9, 1
    %s15 = ssub.s32 %s9, 2
    %s16 = sadd.s32 %s9, 1
    %s17 = ssub.s32 %s9, %s16
    %p18 = scmp.eq.s32.totalorder %s17, 0
    %s20 = sadd.s32 %s19, 1
    %s21 = scalar_select %p18, %s19, %s20
    %p24 = pneg %p18
    %p25 = scmp.eq.s32.totalorder %s9, 1
    %p26 = por %p24, %p25
    %p27 = scmp.ne.s32.totalorder %s19, %s22
    %p28 = scmp.eq.s32.totalorder %s9, 0
    %p29 = por %p27, %p28
    %p30 = scmp.ne.s32.totalorder %s19, %s22
    %p31 = scmp.eq.s32.totalorder %s14, 1
    %p32 = por %p30, %p31
    %p33 = scmp.ne.s32.totalorder %s22, %s23
    %p34 = scmp.eq.s32.totalorder %s14, 0
    %p35 = por %p33, %p34
    %p36 = scmp.ne.s32.totalorder %s22, %s23
    %p37 = scmp.eq.s32.totalorder %s15, 1
    %p38 = por %p36, %p37
    %p40 = scmp.ne.s32.totalorder %s23, %s39
    %p41 = scmp.eq.s32.totalorder %s15, 0
    %p42 = por %p40, %p41
    %s44 = sadd.s32 %s43, 1
    %p47 = scmp.eq.s32.totalorder %s9, 1
    %p48 = scmp.ne.s32.totalorder %s43, %s45
    %p49 = scmp.eq.s32.totalorder %s9, 0
    %p50 = por %p48, %p49
    %p51 = scmp.ne.s32.totalorder %s43, %s45
    %p52 = scmp.eq.s32.totalorder %s14, 1
    %p53 = por %p51, %p52
    %p54 = scmp.ne.s32.totalorder %s45, %s46
    %p55 = scmp.eq.s32.totalorder %s14, 0
    %p56 = por %p54, %p55
    %p57 = scmp.ne.s32.totalorder %s45, %s46
    %p58 = scmp.eq.s32.totalorder %s15, 1
    %p59 = por %p57, %p58
    %p61 = scmp.ne.s32.totalorder %s46, %s60
    %p62 = scmp.eq.s32.totalorder %s15, 0
    %p63 = por %p61, %p62
    %s65 = sadd.s32 %s64, 1
    %p68 = scmp.eq.s32.totalorder %s9, 1
    %p69 = scmp.ne.s32.totalorder %s64, %s66
    %p70 = scmp.eq.s32.totalorder %s9, 0
    %p71 = por %p69, %p70
    %p72 = scmp.ne.s32.totalorder %s64, %s66
    %p73 = scmp.eq.s32.totalorder %s14, 1
    %p74 = por %p72, %p73
    %p75 = scmp.ne.s32.totalorder %s66, %s67
    %p76 = scmp.eq.s32.totalorder %s14, 0
    %p77 = por %p75, %p76
    %p78 = scmp.ne.s32.totalorder %s66, %s67
    %p79 = scmp.eq.s32.totalorder %s15, 1
    %p80 = por %p78, %p79
    %p82 = scmp.ne.s32.totalorder %s67, %s81
    %p83 = scmp.eq.s32.totalorder %s15, 0
    %p84 = por %p82, %p83
    %s85 = ssub.s32 %s9, %s16
    %p86 = scmp.eq.s32.totalorder %s85, 0
    %s88 = sadd.s32 %s87, 1
    %s89 = scalar_select %p86, %s87, %s88
    %p92 = pneg %p86
    %p93 = scmp.eq.s32.totalorder %s9, 1
    %p94 = por %p92, %p93
    %p95 = scmp.ne.s32.totalorder %s87, %s90
    %p96 = scmp.eq.s32.totalorder %s9, 0
    %p97 = por %p95, %p96
    %p98 = scmp.ne.s32.totalorder %s87, %s90
    %p99 = scmp.eq.s32.totalorder %s14, 1
    %p100 = por %p98, %p99
    %p101 = scmp.ne.s32.totalorder %s90, %s91
    %p102 = scmp.eq.s32.totalorder %s14, 0
    %p103 = por %p101, %p102
    %p104 = scmp.ne.s32.totalorder %s90, %s91
    %p105 = scmp.eq.s32.totalorder %s15, 1
    %p106 = por %p104, %p105
    %p108 = scmp.ne.s32.totalorder %s91, %s107
    %p109 = scmp.eq.s32.totalorder %s15, 0
    %p110 = por %p108, %p109
    %p111 = scmp.le.s32.totalorder 1, %s9
    %p112 = scmp.lt.s32.totalorder %s9, 3
    %p113 = pnand %p111, %p112
    %p114 = pneg %p113
    // Predicated region
    $region9: #{residual_cnn_forward.3} parent=5 // pred_check
      _
    $region10: #{residual_cnn_forward.3} parent=5 // pred_check_branch
      %116 = sbr.rel (%p113) target = $region12
    $region11: #{residual_cnn_forward.3} parent=5 // pred_region
      %s117 = ssub.s32 %s9, 1
      // Predicated region
      $region13: #{residual_cnn_forward.3} parent=11 // pred_check
        %p118 = pneg %p56
      $region14: #{residual_cnn_forward.3} parent=11 // pred_check_branch
        %120 = sbr.rel (%p118) target = $region16
      $region15: #{residual_cnn_forward.3} parent=11 // pred_region
        _
      $region16: #{residual_cnn_forward.3} parent=11 // pred_fallthru
        _
      // Predicated region
      $region17: #{residual_cnn_forward.3} parent=11 // pred_check
        %p121 = pneg %p77
      $region18: #{residual_cnn_forward.3} parent=11 // pred_check_branch
        %123 = sbr.rel (%p121) target = $region20
      $region19: #{residual_cnn_forward.3} parent=11 // pred_region
        _
      $region20: #{residual_cnn_forward.3} parent=11 // pred_fallthru
        _
    $region12: #{residual_cnn_forward.3} parent=5 // pred_fallthru
      _
    %p124 = scmp.lt.s32.totalorder %s9, 2
    // Predicated region
    $region21: #{residual_cnn_forward.3} parent=5 // pred_check
      %p125 = pneg %p124
    $region22: #{residual_cnn_forward.3} parent=5 // pred_check_branch
      %127 = sbr.rel (%p125) target = $region24
    $region23: #{residual_cnn_forward.3} parent=5 // pred_region
      // Predicated region
      $region25: #{residual_cnn_forward.3} parent=23 // pred_check
        %p128 = pneg %p29
      $region26: #{residual_cnn_forward.3} parent=23 // pred_check_branch
        %130 = sbr.rel (%p128) target = $region28
      $region27: #{residual_cnn_forward.3} parent=23 // pred_region
        %p131 = scmp.lt.s32.totalorder %s9, 1
        %s132 = scalar_select %p131, %s9, 1
        %s133 = smul.addr %s132, 8
        %s134 = smul.addr %s133, 4
        %s135 = scalar_lea.vmem %s0, %s134
      $region28: #{residual_cnn_forward.3} parent=23 // pred_fallthru
        _
    $region24: #{residual_cnn_forward.3} parent=5 // pred_fallthru
      _
    %p136 = scmp.le.s32.totalorder 1, %s9
    %p137 = scmp.lt.s32.totalorder %s9, 3
    %p138 = pnand %p136, %p137
    %p139 = pneg %p138
    // Predicated region
    $region29: #{residual_cnn_forward.3} parent=5 // pred_check
      _
    $region30: #{residual_cnn_forward.3} parent=5 // pred_check_branch
      %141 = sbr.rel (%p138) target = $region32
    $region31: #{residual_cnn_forward.3} parent=5 // pred_region
      %s142 = ssub.s32 %s9, 1
      %p143 = scmp.lt.s32.totalorder %s14, 1
      %s144 = scalar_select %p143, %s14, 1
      %s145 = smul.addr %s144, 8
      %s146 = smul.addr %s145, 4
      %s147 = scalar_lea.vmem %s0, %s146
      %p148 = pneg %p35
      %p149 = pneg %p32
      %p150 = pneg %p56
      %p151 = pneg %p53
      %p152 = pneg %p77
      %p153 = pneg %p74
      %p154 = pneg %p103
      %p155 = pneg %p100
      %p156 = scmp.lt.s32.totalorder %s14, 1
      %s157 = scalar_select %p156, %s14, 1
      %s158 = smul.addr %s157, 8
      %s159 = smul.addr %s158, 8
      %s160 = scalar_lea.vmem %s3, %s159
      %p161 = scmp.lt.s32.totalorder %s14, 1
      %s162 = scalar_select %p161, %s14, 1
      %s163 = smul.addr %s162, 8
      %s164 = smul.addr %s163, 4
      %s165 = scalar_lea.vmem %s0, %s164
      %p166 = scmp.lt.s32.totalorder %s14, 1
      %s167 = scalar_select %p166, %s14, 1
      %s168 = smul.addr %s167, 8
      %s169 = smul.addr %s168, 8
      %s170 = scalar_lea.vmem %s3, %s169
      %v171 = vld [vmem:[%s165] sm:$0xf]
      %v172 = vld [vmem:[%s165 + $0x4] sm:$0xf]
      %v173 = vld [vmem:[%s165 + $0x8] sm:$0xf]
      %v174 = vld [vmem:[%s165 + $0xc] sm:$0xf]
      %v175 = vld [vmem:[%s165 + $0x10] sm:$0xf]
      %v176 = vld [vmem:[%s165 + $0x14] sm:$0xf]
      %v177 = vld [vmem:[%s165 + $0x18] sm:$0xf]
      %v178 = vld [vmem:[%s165 + $0x1c] sm:$0xf]
      %v179 = vunpack.c.l.bf16 %v171
      %v180 = vunpack.c.l.bf16 %v172
      %v181 = vunpack.c.l.bf16 %v173
      %v182 = vunpack.c.l.bf16 %v174
      %v183 = vunpack.c.l.bf16 %v175
      %v184 = vunpack.c.l.bf16 %v176
      %v185 = vunpack.c.l.bf16 %v177
      %v186 = vunpack.c.l.bf16 %v178
      %v187 = vld [vmem:[%s1] sm:$0x1]
      %v189 = vlaneseq
      %v190 = vshrl.u32 %v189, 7
      %v191 = vsub.s32 0, %v190
      %v192 = vrot.slane %v187, %v191
      %v194 = vmul.f32 %v179, %v192
      %v195 = vmul.f32 %v180, %v192
      %v196 = vmul.f32 %v181, %v192
      %v197 = vmul.f32 %v182, %v192
      %v198 = vmul.f32 %v183, %v192
      %v199 = vmul.f32 %v184, %v192
      %v200 = vmul.f32 %v185, %v192
      %v201 = vmul.f32 %v186, %v192
      %v202 = vld [vmem:[%s2] sm:$0x1]
      %v204 = vlaneseq
      %v205 = vshrl.u32 %v204, 7
      %v206 = vsub.s32 0, %v205
      %v207 = vrot.slane %v202, %v206
      %v209 = vadd.f32 %v194, %v207
      %v210 = vadd.f32 %v195, %v207
      %v211 = vadd.f32 %v196, %v207
      %v212 = vadd.f32 %v197, %v207
      %v213 = vadd.f32 %v198, %v207
      %v214 = vadd.f32 %v199, %v207
      %v215 = vadd.f32 %v200, %v207
      %v216 = vadd.f32 %v201, %v207
      %vm217 = vcmp.ge.f32.partialorder %v209, 0.0
      %vm218 = vcmp.ge.f32.partialorder %v210, 0.0
      %vm219 = vcmp.ge.f32.partialorder %v211, 0.0
      %vm220 = vcmp.ge.f32.partialorder %v212, 0.0
      %vm221 = vcmp.ge.f32.partialorder %v213, 0.0
      %vm222 = vcmp.ge.f32.partialorder %v214, 0.0
      %vm223 = vcmp.ge.f32.partialorder %v215, 0.0
      %vm224 = vcmp.ge.f32.partialorder %v216, 0.0
      %v225 = vmul.f32 %v209, 0.1
      %v226 = vmul.f32 %v210, 0.1
      %v227 = vmul.f32 %v211, 0.1
      %v228 = vmul.f32 %v212, 0.1
      %v229 = vmul.f32 %v213, 0.1
      %v230 = vmul.f32 %v214, 0.1
      %v231 = vmul.f32 %v215, 0.1
      %v232 = vmul.f32 %v216, 0.1
      %v233 = vsel %vm217, %v209, %v225
      %v234 = vsel %vm218, %v210, %v226
      %v235 = vsel %vm219, %v211, %v227
      %v236 = vsel %vm220, %v212, %v228
      %v237 = vsel %vm221, %v213, %v229
      %v238 = vsel %vm222, %v214, %v230
      %v239 = vsel %vm223, %v215, %v231
      %v240 = vsel %vm224, %v216, %v232
      %vm241 = vcmask 64512
      %242 = vst.msk [vmem:[%s170] sm:$0xff] %vm241, %v233
      %243 = vst.msk [vmem:[%s170 + $0x8] sm:$0xff] %vm241, %v234
      %244 = vst.msk [vmem:[%s170 + $0x10] sm:$0xff] %vm241, %v235
      %245 = vst.msk [vmem:[%s170 + $0x18] sm:$0xff] %vm241, %v236
      %246 = vst.msk [vmem:[%s170 + $0x20] sm:$0xff] %vm241, %v237
      %247 = vst.msk [vmem:[%s170 + $0x28] sm:$0xff] %vm241, %v238
      %248 = vst.msk [vmem:[%s170 + $0x30] sm:$0xff] %vm241, %v239
      %249 = vst.msk [vmem:[%s170 + $0x38] sm:$0xff] %vm241, %v240
      %p250 = scmp.lt.s32.totalorder %s14, 1
      %s251 = scalar_select %p250, %s14, 1
      %s252 = smul.addr %s251, 8
      %s253 = smul.addr %s252, 8
      %s254 = scalar_lea.vmem %s3, %s253
      // Predicated region
      $region33: #{residual_cnn_forward.3} parent=31 // pred_check
        %p255 = pneg %p100
      $region34: #{residual_cnn_forward.3} parent=31 // pred_check_branch
        %257 = sbr.rel (%p255) target = $region36
      $region35: #{residual_cnn_forward.3} parent=31 // pred_region
        _
      $region36: #{residual_cnn_forward.3} parent=31 // pred_fallthru
        _
    $region32: #{residual_cnn_forward.3} parent=5 // pred_fallthru
      _
    %p258 = scmp.le.s32.totalorder 2, %s9
    // Predicated region
    $region37: #{residual_cnn_forward.3} parent=5 // pred_check
      %p259 = pneg %p258
    $region38: #{residual_cnn_forward.3} parent=5 // pred_check_branch
      %261 = sbr.rel (%p259) target = $region40
    $region39: #{residual_cnn_forward.3} parent=5 // pred_region
      %s262 = ssub.s32 %s9, 2
      // Predicated region
      $region41: #{residual_cnn_forward.3} parent=39 // pred_check
        %p263 = pneg %p106
      $region42: #{residual_cnn_forward.3} parent=39 // pred_check_branch
        %265 = sbr.rel (%p263) target = $region44
      $region43: #{residual_cnn_forward.3} parent=39 // pred_region
        %p266 = scmp.lt.s32.totalorder %s15, 1
        %s267 = scalar_select %p266, %s15, 1
        %s268 = smul.addr %s267, 8
        %s269 = smul.addr %s268, 8
        %s270 = scalar_lea.vmem %s3, %s269
      $region44: #{residual_cnn_forward.3} parent=39 // pred_fallthru
        _
    $region40: #{residual_cnn_forward.3} parent=5 // pred_fallthru
      _
  $region6: #{residual_cnn_forward.3} parent=0 // loop_footer
    %s13 = sadd.s32 1, %s9
  $region7: #{residual_cnn_forward.3} parent=0 // loop_footer_branch
    %8 = sbr.rel target = $region3
  $region8: #{residual_cnn_forward.3} parent=0 // loop_exit
    _

// kernel: residual_cnn_forward.2
$region0: #{residual_cnn_forward.2}
  #allocation0 [shape = 'u32[]', space=smem, size = 0x4, offset = 0x4, fixed_abs, tag = 'smem constant byte address 0x4 - core index']
  #allocation1 [shape = 'u32[144,128]{1,0:T(1,128)}', space=vmem, size = 0x12000, scoped, tag = 'internal scratch']
  %s0 = inlined_call_operand.vmem [shape: bf16[2,64,48], index: 0, kind: input, shape index: {}]
  %s1 = inlined_call_operand.vmem [shape: s32[64,1], index: 1, kind: input, shape index: {}]
  %s2 = inlined_call_operand.vmem [shape: s32[64,1], index: 2, kind: input, shape index: {}]
  %s3 = inlined_call_operand.vmem [shape: bf16[48,8], index: 3, kind: input, shape index: {}]
  %s4 = inlined_call_operand.vmem [shape: f32[1,8], index: 4, kind: input, shape index: {}]
  %s5 = inlined_call_operand.vmem [shape: bf16[48,4], index: 5, kind: input, shape index: {}]
  %s6 = inlined_call_operand.vmem [shape: f32[1,4], index: 6, kind: input, shape index: {}]
  %s7 = inlined_call_operand.vmem [shape: bf16[9,4,8], index: 7, kind: input, shape index: {}]
  %s8 = inlined_call_operand.vmem [shape: f32[1,8], index: 8, kind: input, shape index: {}]
  %s9 = inlined_call_operand.vmem [shape: bf16[2,64,8], index: 9, kind: output, shape index: {0}]
  %s10 = inlined_call_operand.vmem [shape: f32[2,1,8], index: 10, kind: output, shape index: {1}]
  %s11 = inlined_call_operand.vmem [shape: f32[2,1,8], index: 11, kind: output, shape index: {2}]
  %12 = xla_tuple %s9, %s10, %s11
  %s13 = sld [smem:[#allocation0]]
  $region85: #{residual_cnn_forward.2} parent=0
    _
  %s15 = ssub.s32 1, %s13
  %s16 = scalar_select 0, %s15, %s13
  loop: start=0, step=1, limit=4
  $region2: #{residual_cnn_forward.2} parent=0 // loop_pre_header
    _
  $region3: #{residual_cnn_forward.2} parent=0 // loop_header
    %s18 = sphi 0, %s22
    %p19 = scmp.ge.s32.totalorder %s18, 4
    %s28 = sphi 0, %s30
    %s31 = sphi 0, %s28
    %s32 = sphi 0, %s31
    %s48 = sphi 0, %s32
    %s52 = sphi 0, %s52
    %s54 = sphi 0, %s52
    %s55 = sphi 0, %s54
    %s69 = sphi 0, %s55
    %s73 = sphi 0, %s73
    %s75 = sphi 0, %s73
    %s76 = sphi 0, %s75
    %s90 = sphi 0, %s76
    %s94 = sphi 0, %s94
    %s96 = sphi 0, %s94
    %s97 = sphi 0, %s96
    %s111 = sphi 0, %s97
    %s115 = sphi 0, %s115
    %s117 = sphi 0, %s115
    %s118 = sphi 0, %s117
    %s132 = sphi 0, %s118
    %s136 = sphi 0, %s136
    %s138 = sphi 0, %s136
    %s139 = sphi 0, %s138
    %s153 = sphi 0, %s139
    %s157 = sphi 0, %s157
    %s159 = sphi 0, %s157
    %s160 = sphi 0, %s159
    %s174 = sphi 0, %s160
    %s178 = sphi 0, %s178
    %s180 = sphi 0, %s178
    %s181 = sphi 0, %s180
    %s195 = sphi 0, %s181
    %s199 = sphi 0, %s199
    %s201 = sphi 0, %s199
    %s202 = sphi 0, %s201
    %s216 = sphi 0, %s202
    %s222 = sphi 0, %s224
    %s225 = sphi 0, %s222
    %s226 = sphi 0, %s225
    %s242 = sphi 0, %s226
    %s248 = sphi 0, %s250
    %s251 = sphi 0, %s248
    %s252 = sphi 0, %s251
    %s268 = sphi 0, %s252
    %s274 = sphi 0, %s276
    %s277 = sphi 0, %s274
    %s278 = sphi 0, %s277
    %s294 = sphi 0, %s278
  $region4: #{residual_cnn_forward.2} parent=0 // loop_header_branch
    %21 = sbr.rel (%p19) target = $region8
  $region5: #{residual_cnn_forward.2} parent=0 // loop_body
    %s23 = ssub.s32 %s18, 1
    %s24 = ssub.s32 %s18, 2
    %s25 = sadd.s32 %s18, 1
    %s26 = ssub.s32 %s18, %s25
    %p27 = scmp.eq.s32.totalorder %s26, 0
    %s29 = sadd.s32 %s28, 1
    %s30 = scalar_select %p27, %s28, %s29
    %p33 = pneg %p27
    %p34 = scmp.eq.s32.totalorder %s18, 1
    %p35 = por %p33, %p34
    %p36 = scmp.ne.s32.totalorder %s28, %s31
    %p37 = scmp.eq.s32.totalorder %s18, 0
    %p38 = por %p36, %p37
    %p39 = scmp.ne.s32.totalorder %s28, %s31
    %p40 = scmp.eq.s32.totalorder %s23, 1
    %p41 = por %p39, %p40
    %p42 = scmp.ne.s32.totalorder %s31, %s32
    %p43 = scmp.eq.s32.totalorder %s23, 0
    %p44 = por %p42, %p43
    %p45 = scmp.ne.s32.totalorder %s31, %s32
    %p46 = scmp.eq.s32.totalorder %s24, 1
    %p47 = por %p45, %p46
    %p49 = scmp.ne.s32.totalorder %s32, %s48
    %p50 = scmp.eq.s32.totalorder %s24, 0
    %p51 = por %p49, %p50
    %s53 = sadd.s32 %s52, 1
    %p56 = scmp.eq.s32.totalorder %s18, 1
    %p57 = scmp.ne.s32.totalorder %s52, %s54
    %p58 = scmp.eq.s32.totalorder %s18, 0
    %p59 = por %p57, %p58
    %p60 = scmp.ne.s32.totalorder %s52, %s54
    %p61 = scmp.eq.s32.totalorder %s23, 1
    %p62 = por %p60, %p61
    %p63 = scmp.ne.s32.totalorder %s54, %s55
    %p64 = scmp.eq.s32.totalorder %s23, 0
    %p65 = por %p63, %p64
    %p66 = scmp.ne.s32.totalorder %s54, %s55
    %p67 = scmp.eq.s32.totalorder %s24, 1
    %p68 = por %p66, %p67
    %p70 = scmp.ne.s32.totalorder %s55, %s69
    %p71 = scmp.eq.s32.totalorder %s24, 0
    %p72 = por %p70, %p71
    %s74 = sadd.s32 %s73, 1
    %p77 = scmp.eq.s32.totalorder %s18, 1
    %p78 = scmp.ne.s32.totalorder %s73, %s75
    %p79 = scmp.eq.s32.totalorder %s18, 0
    %p80 = por %p78, %p79
    %p81 = scmp.ne.s32.totalorder %s73, %s75
    %p82 = scmp.eq.s32.totalorder %s23, 1
    %p83 = por %p81, %p82
    %p84 = scmp.ne.s32.totalorder %s75, %s76
    %p85 = scmp.eq.s32.totalorder %s23, 0
    %p86 = por %p84, %p85
    %p87 = scmp.ne.s32.totalorder %s75, %s76
    %p88 = scmp.eq.s32.totalorder %s24, 1
    %p89 = por %p87, %p88
    %p91 = scmp.ne.s32.totalorder %s76, %s90
    %p92 = scmp.eq.s32.totalorder %s24, 0
    %p93 = por %p91, %p92
    %s95 = sadd.s32 %s94, 1
    %p98 = scmp.eq.s32.totalorder %s18, 1
    %p99 = scmp.ne.s32.totalorder %s94, %s96
    %p100 = scmp.eq.s32.totalorder %s18, 0
    %p101 = por %p99, %p100
    %p102 = scmp.ne.s32.totalorder %s94, %s96
    %p103 = scmp.eq.s32.totalorder %s23, 1
    %p104 = por %p102, %p103
    %p105 = scmp.ne.s32.totalorder %s96, %s97
    %p106 = scmp.eq.s32.totalorder %s23, 0
    %p107 = por %p105, %p106
    %p108 = scmp.ne.s32.totalorder %s96, %s97
    %p109 = scmp.eq.s32.totalorder %s24, 1
    %p110 = por %p108, %p109
    %p112 = scmp.ne.s32.totalorder %s97, %s111
    %p113 = scmp.eq.s32.totalorder %s24, 0
    %p114 = por %p112, %p113
    %s116 = sadd.s32 %s115, 1
    %p119 = scmp.eq.s32.totalorder %s18, 1
    %p120 = scmp.ne.s32.totalorder %s115, %s117
    %p121 = scmp.eq.s32.totalorder %s18, 0
    %p122 = por %p120, %p121
    %p123 = scmp.ne.s32.totalorder %s115, %s117
    %p124 = scmp.eq.s32.totalorder %s23, 1
    %p125 = por %p123, %p124
    %p126 = scmp.ne.s32.totalorder %s117, %s118
    %p127 = scmp.eq.s32.totalorder %s23, 0
    %p128 = por %p126, %p127
    %p129 = scmp.ne.s32.totalorder %s117, %s118
    %p130 = scmp.eq.s32.totalorder %s24, 1
    %p131 = por %p129, %p130
    %p133 = scmp.ne.s32.totalorder %s118, %s132
    %p134 = scmp.eq.s32.totalorder %s24, 0
    %p135 = por %p133, %p134
    %s137 = sadd.s32 %s136, 1
    %p140 = scmp.eq.s32.totalorder %s18, 1
    %p141 = scmp.ne.s32.totalorder %s136, %s138
    %p142 = scmp.eq.s32.totalorder %s18, 0
    %p143 = por %p141, %p142
    %p144 = scmp.ne.s32.totalorder %s136, %s138
    %p145 = scmp.eq.s32.totalorder %s23, 1
    %p146 = por %p144, %p145
    %p147 = scmp.ne.s32.totalorder %s138, %s139
    %p148 = scmp.eq.s32.totalorder %s23, 0
    %p149 = por %p147, %p148
    %p150 = scmp.ne.s32.totalorder %s138, %s139
    %p151 = scmp.eq.s32.totalorder %s24, 1
    %p152 = por %p150, %p151
    %p154 = scmp.ne.s32.totalorder %s139, %s153
    %p155 = scmp.eq.s32.totalorder %s24, 0
    %p156 = por %p154, %p155
    %s158 = sadd.s32 %s157, 1
    %p161 = scmp.eq.s32.totalorder %s18, 1
    %p162 = scmp.ne.s32.totalorder %s157, %s159
    %p163 = scmp.eq.s32.totalorder %s18, 0
    %p164 = por %p162, %p163
    %p165 = scmp.ne.s32.totalorder %s157, %s159
    %p166 = scmp.eq.s32.totalorder %s23, 1
    %p167 = por %p165, %p166
    %p168 = scmp.ne.s32.totalorder %s159, %s160
    %p169 = scmp.eq.s32.totalorder %s23, 0
    %p170 = por %p168, %p169
    %p171 = scmp.ne.s32.totalorder %s159, %s160
    %p172 = scmp.eq.s32.totalorder %s24, 1
    %p173 = por %p171, %p172
    %p175 = scmp.ne.s32.totalorder %s160, %s174
    %p176 = scmp.eq.s32.totalorder %s24, 0
    %p177 = por %p175, %p176
    %s179 = sadd.s32 %s178, 1
    %p182 = scmp.eq.s32.totalorder %s18, 1
    %p183 = scmp.ne.s32.totalorder %s178, %s180
    %p184 = scmp.eq.s32.totalorder %s18, 0
    %p185 = por %p183, %p184
    %p186 = scmp.ne.s32.totalorder %s178, %s180
    %p187 = scmp.eq.s32.totalorder %s23, 1
    %p188 = por %p186, %p187
    %p189 = scmp.ne.s32.totalorder %s180, %s181
    %p190 = scmp.eq.s32.totalorder %s23, 0
    %p191 = por %p189, %p190
    %p192 = scmp.ne.s32.totalorder %s180, %s181
    %p193 = scmp.eq.s32.totalorder %s24, 1
    %p194 = por %p192, %p193
    %p196 = scmp.ne.s32.totalorder %s181, %s195
    %p197 = scmp.eq.s32.totalorder %s24, 0
    %p198 = por %p196, %p197
    %s200 = sadd.s32 %s199, 1
    %p203 = scmp.eq.s32.totalorder %s18, 1
    %p204 = scmp.ne.s32.totalorder %s199, %s201
    %p205 = scmp.eq.s32.totalorder %s18, 0
    %p206 = por %p204, %p205
    %p207 = scmp.ne.s32.totalorder %s199, %s201
    %p208 = scmp.eq.s32.totalorder %s23, 1
    %p209 = por %p207, %p208
    %p210 = scmp.ne.s32.totalorder %s201, %s202
    %p211 = scmp.eq.s32.totalorder %s23, 0
    %p212 = por %p210, %p211
    %p213 = scmp.ne.s32.totalorder %s201, %s202
    %p214 = scmp.eq.s32.totalorder %s24, 1
    %p215 = por %p213, %p214
    %p217 = scmp.ne.s32.totalorder %s202, %s216
    %p218 = scmp.eq.s32.totalorder %s24, 0
    %p219 = por %p217, %p218
    %s220 = ssub.s32 %s18, %s25
    %p221 = scmp.eq.s32.totalorder %s220, 0
    %s223 = sadd.s32 %s222, 1
    %s224 = scalar_select %p221, %s222, %s223
    %p227 = pneg %p221
    %p228 = scmp.eq.s32.totalorder %s18, 1
    %p229 = por %p227, %p228
    %p230 = scmp.ne.s32.totalorder %s222, %s225
    %p231 = scmp.eq.s32.totalorder %s18, 0
    %p232 = por %p230, %p231
    %p233 = scmp.ne.s32.totalorder %s222, %s225
    %p234 = scmp.eq.s32.totalorder %s23, 1
    %p235 = por %p233, %p234
    %p236 = scmp.ne.s32.totalorder %s225, %s226
    %p237 = scmp.eq.s32.totalorder %s23, 0
    %p238 = por %p236, %p237
    %p239 = scmp.ne.s32.totalorder %s225, %s226
    %p240 = scmp.eq.s32.totalorder %s24, 1
    %p241 = por %p239, %p240
    %p243 = scmp.ne.s32.totalorder %s226, %s242
    %p244 = scmp.eq.s32.totalorder %s24, 0
    %p245 = por %p243, %p244
    %s246 = ssub.s32 %s18, %s25
    %p247 = scmp.eq.s32.totalorder %s246, 0
    %s249 = sadd.s32 %s248, 1
    %s250 = scalar_select %p247, %s248, %s249
    %p253 = pneg %p247
    %p254 = scmp.eq.s32.totalorder %s18, 1
    %p255 = por %p253, %p254
    %p256 = scmp.ne.s32.totalorder %s248, %s251
    %p257 = scmp.eq.s32.totalorder %s18, 0
    %p258 = por %p256, %p257
    %p259 = scmp.ne.s32.totalorder %s248, %s251
    %p260 = scmp.eq.s32.totalorder %s23, 1
    %p261 = por %p259, %p260
    %p262 = scmp.ne.s32.totalorder %s251, %s252
    %p263 = scmp.eq.s32.totalorder %s23, 0
    %p264 = por %p262, %p263
    %p265 = scmp.ne.s32.totalorder %s251, %s252
    %p266 = scmp.eq.s32.totalorder %s24, 1
    %p267 = por %p265, %p266
    %p269 = scmp.ne.s32.totalorder %s252, %s268
    %p270 = scmp.eq.s32.totalorder %s24, 0
    %p271 = por %p269, %p270
    %s272 = ssub.s32 %s18, %s25
    %p273 = scmp.eq.s32.totalorder %s272, 0
    %s275 = sadd.s32 %s274, 1
    %s276 = scalar_select %p273, %s274, %s275
    %p279 = pneg %p273
    %p280 = scmp.eq.s32.totalorder %s18, 1
    %p281 = por %p279, %p280
    %p282 = scmp.ne.s32.totalorder %s274, %s277
    %p283 = scmp.eq.s32.totalorder %s18, 0
    %p284 = por %p282, %p283
    %p285 = scmp.ne.s32.totalorder %s274, %s277
    %p286 = scmp.eq.s32.totalorder %s23, 1
    %p287 = por %p285, %p286
    %p288 = scmp.ne.s32.totalorder %s277, %s278
    %p289 = scmp.eq.s32.totalorder %s23, 0
    %p290 = por %p288, %p289
    %p291 = scmp.ne.s32.totalorder %s277, %s278
    %p292 = scmp.eq.s32.totalorder %s24, 1
    %p293 = por %p291, %p292
    %p295 = scmp.ne.s32.totalorder %s278, %s294
    %p296 = scmp.eq.s32.totalorder %s24, 0
    %p297 = por %p295, %p296
    %p298 = scmp.le.s32.totalorder 1, %s18
    %p299 = scmp.lt.s32.totalorder %s18, 3
    %p300 = pnand %p298, %p299
    %p301 = pneg %p300
    // Predicated region
    $region9: #{residual_cnn_forward.2} parent=5 // pred_check
      _
    $region10: #{residual_cnn_forward.2} parent=5 // pred_check_branch
      %303 = sbr.rel (%p300) target = $region12
    $region11: #{residual_cnn_forward.2} parent=5 // pred_region
      %s304 = ssub.s32 %s18, 1
      // Predicated region
      $region13: #{residual_cnn_forward.2} parent=11 // pred_check
        %p305 = pneg %p65
      $region14: #{residual_cnn_forward.2} parent=11 // pred_check_branch
        %307 = sbr.rel (%p305) target = $region16
      $region15: #{residual_cnn_forward.2} parent=11 // pred_region
        _
      $region16: #{residual_cnn_forward.2} parent=11 // pred_fallthru
        _
      // Predicated region
      $region17: #{residual_cnn_forward.2} parent=11 // pred_check
        %p308 = pneg %p86
      $region18: #{residual_cnn_forward.2} parent=11 // pred_check_branch
        %310 = sbr.rel (%p308) target = $region20
      $region19: #{residual_cnn_forward.2} parent=11 // pred_region
        _
      $region20: #{residual_cnn_forward.2} parent=11 // pred_fallthru
        _
      // Predicated region
      $region21: #{residual_cnn_forward.2} parent=11 // pred_check
        %p311 = pneg %p107
      $region22: #{residual_cnn_forward.2} parent=11 // pred_check_branch
        %313 = sbr.rel (%p311) target = $region24
      $region23: #{residual_cnn_forward.2} parent=11 // pred_region
        _
      $region24: #{residual_cnn_forward.2} parent=11 // pred_fallthru
        _
      // Predicated region
      $region25: #{residual_cnn_forward.2} parent=11 // pred_check
        %p314 = pneg %p128
      $region26: #{residual_cnn_forward.2} parent=11 // pred_check_branch
        %316 = sbr.rel (%p314) target = $region28
      $region27: #{residual_cnn_forward.2} parent=11 // pred_region
        _
      $region28: #{residual_cnn_forward.2} parent=11 // pred_fallthru
        _
      // Predicated region
      $region29: #{residual_cnn_forward.2} parent=11 // pred_check
        %p317 = pneg %p149
      $region30: #{residual_cnn_forward.2} parent=11 // pred_check_branch
        %319 = sbr.rel (%p317) target = $region32
      $region31: #{residual_cnn_forward.2} parent=11 // pred_region
        _
      $region32: #{residual_cnn_forward.2} parent=11 // pred_fallthru
        _
      // Predicated region
      $region33: #{residual_cnn_forward.2} parent=11 // pred_check
        %p320 = pneg %p170
      $region34: #{residual_cnn_forward.2} parent=11 // pred_check_branch
        %322 = sbr.rel (%p320) target = $region36
      $region35: #{residual_cnn_forward.2} parent=11 // pred_region
        _
      $region36: #{residual_cnn_forward.2} parent=11 // pred_fallthru
        _
      // Predicated region
      $region37: #{residual_cnn_forward.2} parent=11 // pred_check
        %p323 = pneg %p191
      $region38: #{residual_cnn_forward.2} parent=11 // pred_check_branch
        %325 = sbr.rel (%p323) target = $region40
      $region39: #{residual_cnn_forward.2} parent=11 // pred_region
        _
      $region40: #{residual_cnn_forward.2} parent=11 // pred_fallthru
        _
      // Predicated region
      $region41: #{residual_cnn_forward.2} parent=11 // pred_check
        %p326 = pneg %p212
      $region42: #{residual_cnn_forward.2} parent=11 // pred_check_branch
        %328 = sbr.rel (%p326) target = $region44
      $region43: #{residual_cnn_forward.2} parent=11 // pred_region
        _
      $region44: #{residual_cnn_forward.2} parent=11 // pred_fallthru
        _
    $region12: #{residual_cnn_forward.2} parent=5 // pred_fallthru
      _
    %p329 = scmp.lt.s32.totalorder %s18, 2
    // Predicated region
    $region45: #{residual_cnn_forward.2} parent=5 // pred_check
      %p330 = pneg %p329
    $region46: #{residual_cnn_forward.2} parent=5 // pred_check_branch
      %332 = sbr.rel (%p330) target = $region48
    $region47: #{residual_cnn_forward.2} parent=5 // pred_region
      // Predicated region
      $region49: #{residual_cnn_forward.2} parent=47 // pred_check
        %p333 = pneg %p38
      $region50: #{residual_cnn_forward.2} parent=47 // pred_check_branch
        %335 = sbr.rel (%p333) target = $region52
      $region51: #{residual_cnn_forward.2} parent=47 // pred_region
        %p336 = scmp.lt.s32.totalorder %s18, 1
        %s337 = scalar_select %p336, %s18, 1
        %s338 = smul.addr %s337, 8
        %s339 = smul.addr %s338, 4
        %s340 = scalar_lea.vmem %s0, %s339
      $region52: #{residual_cnn_forward.2} parent=47 // pred_fallthru
        _
    $region48: #{residual_cnn_forward.2} parent=5 // pred_fallthru
      _
    %p341 = scmp.le.s32.totalorder 1, %s18
    %p342 = scmp.lt.s32.totalorder %s18, 3
    %p343 = pnand %p341, %p342
    %p344 = pneg %p343
    // Predicated region
    $region53: #{residual_cnn_forward.2} parent=5 // pred_check
      _
    $region54: #{residual_cnn_forward.2} parent=5 // pred_check_branch
      %346 = sbr.rel (%p343) target = $region56
    $region55: #{residual_cnn_forward.2} parent=5 // pred_region
      %s347 = ssub.s32 %s18, 1
      %p348 = scmp.lt.s32.totalorder %s23, 1
      %s349 = scalar_select %p348, %s23, 1
      %s350 = smul.addr %s349, 8
      %s351 = smul.addr %s350, 4
      %s352 = scalar_lea.vmem %s0, %s351
      %p353 = pneg %p44
      %p354 = pneg %p41
      %p355 = pneg %p65
      %p356 = pneg %p62
      %p357 = pneg %p86
      %p358 = pneg %p83
      %p359 = pneg %p107
      %p360 = pneg %p104
      %p361 = pneg %p128
      %p362 = pneg %p125
      %p363 = pneg %p149
      %p364 = pneg %p146
      %p365 = pneg %p170
      %p366 = pneg %p167
      %p367 = pneg %p191
      %p368 = pneg %p188
      %p369 = pneg %p212
      %p370 = pneg %p209
      %p371 = pneg %p238
      %p372 = pneg %p235
      %p373 = scmp.lt.s32.totalorder %s23, 1
      %s374 = scalar_select %p373, %s23, 1
      %s375 = smul.addr %s374, 8
      %s376 = smul.addr %s375, 4
      %s377 = scalar_lea.vmem %s9, %s376
      %p378 = pneg %p264
      %p379 = pneg %p261
      %p380 = scmp.lt.s32.totalorder %s23, 1
      %s381 = scalar_select %p380, %s23, 1
      %s382 = scalar_lea.vmem %s10, %s381
      %p383 = pneg %p290
      %p384 = pneg %p287
      %p385 = scmp.lt.s32.totalorder %s23, 1
      %s386 = scalar_select %p385, %s23, 1
      %s387 = scalar_lea.vmem %s11, %s386
      %p388 = scmp.lt.s32.totalorder %s23, 1
      %s389 = scalar_select %p388, %s23, 1
      %s390 = smul.addr %s389, 8
      %s391 = smul.addr %s390, 4
      %s392 = scalar_lea.vmem %s0, %s391
      %p393 = scmp.lt.s32.totalorder %s23, 1
      %s394 = scalar_select %p393, %s23, 1
      %s395 = smul.addr %s394, 8
      %s396 = smul.addr %s395, 4
      %s397 = scalar_lea.vmem %s9, %s396
      %p398 = scmp.lt.s32.totalorder %s23, 1
      %s399 = scalar_select %p398, %s23, 1
      %s400 = scalar_lea.vmem %s10, %s399
      %p401 = scmp.lt.s32.totalorder %s23, 1
      %s402 = scalar_select %p401, %s23, 1
      %s403 = scalar_lea.vmem %s11, %s402
      %v405 = vld [vmem:[%s392] sm:$0xf]
      %v406 = vld [vmem:[%s392 + $0x4] sm:$0xf]
      %v407 = vld [vmem:[%s392 + $0x8] sm:$0xf]
      %v408 = vld [vmem:[%s392 + $0xc] sm:$0xf]
      %v409 = vld [vmem:[%s392 + $0x10] sm:$0xf]
      %v410 = vld [vmem:[%s392 + $0x14] sm:$0xf]
      %v411 = vld [vmem:[%s392 + $0x18] sm:$0xf]
      %v412 = vld [vmem:[%s392 + $0x1c] sm:$0xf]
      %v413 = vld [vmem:[%s3] sm:$0xf]
      %v414 = vld [vmem:[%s3 + $0x4] sm:$0xf]
      %v415 = vld [vmem:[%s3 + $0x8] sm:$0xf]
      %v416 = vld [vmem:[%s3 + $0xc] sm:$0xf]
      %v417 = vld [vmem:[%s3 + $0x10] sm:$0xf]
      %v418 = vld [vmem:[%s3 + $0x14] sm:$0xf]
      %v419 = vld [vmem:[%s4] sm:$0x1]
      %v421 = vlaneseq
      %v422 = vshrl.u32 %v421, 7
      %v423 = vsub.s32 0, %v422
      %v424 = vrot.slane %v419, %v423
      %v434 = vunpack.c.l.b16 %v405
      %v435 = vunpack.c.l.b16 %v406
      %v436 = vunpack.c.l.b16 %v407
      %v437 = vunpack.c.l.b16 %v408
      %v438 = vunpack.c.l.b16 %v409
      %v439 = vunpack.c.l.b16 %v410
      %v440 = vunpack.c.l.b16 %v411
      %v441 = vunpack.c.l.b16 %v412
      %v442 = vpack.c.b16 %v435, %v434
      %v443 = vpack.c.b16 %v437, %v436
      %v444 = vpack.c.b16 %v439, %v438
      %v445 = vpack.c.b16 %v441, %v440
      %v452 = vunpack.c.l.b16 %v413
      %v453 = vunpack.c.l.b16 %v414
      %v454 = vunpack.c.l.b16 %v415
      %v455 = vunpack.c.l.b16 %v416
      %v456 = vunpack.c.l.b16 %v417
      %v457 = vunpack.c.l.b16 %v418
      %v458 = vpack.c.b16 %v453, %v452
      %v459 = vpack.c.b16 %v455, %v454
      %v460 = vpack.c.b16 %v457, %v456
      %vm464 = vcmask 392192
      %v466 = vsel %vm464, %v442, 0
      %v469 = vsel %vm464, %v443, 0
      %v472 = vsel %vm464, %v444, 0
      %v475 = vsel %vm464, %v445, 0
      %477 = vmatprep.subr.bf16.mxu0 0
      %478 = vmatpush1.bf16.msra.mxu0 %v458
      %479 = vmatprep.subr.bf16.mxu0 0
      %480 = vmatpush1.bf16.msra.mxu0 %v459
      %481 = vmatprep.subr.bf16.mxu0 0
      %482 = vmatpush1.bf16.msra.mxu0 %v460
      %483 = vmatprep.subr.bf16.mxu0 0
      %484 = vmatpush1.bf16.msra.mxu0 0
      %485 = vmatprep.subr.bf16.mxu0 0
      %486 = vmatpush1.bf16.msra.mxu0 0
      %487 = vmatprep.subr.bf16.mxu0 0
      %488 = vmatpush1.bf16.msra.mxu0 0
      %489 = vmatprep.subr.bf16.mxu0 0
      %490 = vmatpush1.bf16.msra.mxu0 0
      %491 = vmatprep.subr.bf16.mxu0 0
      %492 = vmatpush1.bf16.msra.mxu0 0
      %493 = vmatprep.subr.bf16.mxu0 0
      %494 = vmatpush1.bf16.msra.mxu0 0
      %495 = vmatprep.subr.bf16.mxu0 0
      %496 = vmatpush1.bf16.msra.mxu0 0
      %497 = vmatprep.subr.bf16.mxu0 0
      %498 = vmatpush1.bf16.msra.mxu0 0
      %499 = vmatprep.subr.bf16.mxu0 0
      %500 = vmatpush1.bf16.msra.mxu0 0
      %501 = vmatprep.subr.bf16.mxu0 0
      %502 = vmatpush1.bf16.msra.mxu0 0
      %503 = vmatprep.subr.bf16.mxu0 0
      %504 = vmatpush1.bf16.msra.mxu0 0
      %505 = vmatprep.subr.bf16.mxu0 0
      %506 = vmatpush1.bf16.msra.mxu0 0
      %507 = vmatprep.subr.bf16.mxu0 0
      %508 = vmatpush1.bf16.msra.mxu0 0
      %509 = vmatprep.mubr.bf16.mxu0 0
      %510 = vmatmul.mubr.bf16.gmra.mrb[0].mxu0 %v466
      %v511 = vpop.f32.mrb[0].mxu0
      %v512 = vadd.f32 %v424, %v511
      %v513 = vpop.f32.mrb[0].mxu0
      %v514 = vpop.f32.mrb[0].mxu0
      %v515 = vadd.f32 %v424, %v514
      %v516 = vpop.f32.mrb[0].mxu0
      %517 = vmatprep.mubr.bf16.mxu0 0
      %518 = vmatmul.mubr.bf16.gmra.mrb[0].mxu0 %v469
      %v519 = vpop.f32.mrb[0].mxu0
      %v520 = vadd.f32 %v424, %v519
      %v521 = vpop.f32.mrb[0].mxu0
      %v522 = vpop.f32.mrb[0].mxu0
      %v523 = vadd.f32 %v424, %v522
      %v524 = vpop.f32.mrb[0].mxu0
      %525 = vmatprep.mubr.bf16.mxu0 0
      %526 = vmatmul.mubr.bf16.gmra.mrb[0].mxu0 %v472
      %v527 = vpop.f32.mrb[0].mxu0
      %v528 = vadd.f32 %v424, %v527
      %v529 = vpop.f32.mrb[0].mxu0
      %v530 = vpop.f32.mrb[0].mxu0
      %v531 = vadd.f32 %v424, %v530
      %v532 = vpop.f32.mrb[0].mxu0
      %533 = vmatprep.mubr.bf16.mxu0 0
      %534 = vmatmul.mubr.bf16.gmra.mrb[0].mxu0 %v475
      %v535 = vpop.f32.mrb[0].mxu0
      %v536 = vadd.f32 %v424, %v535
      %v537 = vpop.f32.mrb[0].mxu0
      %v538 = vpop.f32.mrb[0].mxu0
      %v539 = vadd.f32 %v424, %v538
      %v540 = vpop.f32.mrb[0].mxu0
      %541 = vdwg.mxu0
      %v542 = vld [vmem:[%s5] sm:$0xf]
      %v543 = vld [vmem:[%s5 + $0x4] sm:$0xf]
      %v544 = vld [vmem:[%s5 + $0x8] sm:$0xf]
      %v545 = vld [vmem:[%s5 + $0xc] sm:$0xf]
      %v546 = vld [vmem:[%s5 + $0x10] sm:$0xf]
      %v547 = vld [vmem:[%s5 + $0x14] sm:$0xf]
      %v548 = vld [vmem:[%s6] sm:$0x1]
      %v550 = vlaneseq
      %v551 = vshrl.u32 %v550, 7
      %v552 = vsub.s32 0, %v551
      %v553 = vrot.slane %v548, %v552
      %v561 = vunpack.c.l.b16 %v542
      %v562 = vunpack.c.l.b16 %v543
      %v563 = vunpack.c.l.b16 %v544
      %v564 = vunpack.c.l.b16 %v545
      %v565 = vunpack.c.l.b16 %v546
      %v566 = vunpack.c.l.b16 %v547
      %v567 = vpack.c.b16 %v562, %v561
      %v568 = vpack.c.b16 %v564, %v563
      %v569 = vpack.c.b16 %v566, %v565
      %573 = vmatprep.subr.bf16.mxu0 0
      %574 = vmatpush1.bf16.msra.mxu0 %v567
      %575 = vmatprep.subr.bf16.mxu0 0
      %576 = vmatpush1.bf16.msra.mxu0 %v568
      %577 = vmatprep.subr.bf16.mxu0 0
      %578 = vmatpush1.bf16.msra.mxu0 %v569
      %579 = vmatprep.subr.bf16.mxu0 0
      %580 = vmatpush1.bf16.msra.mxu0 0
      %581 = vmatprep.subr.bf16.mxu0 0
      %582 = vmatpush1.bf16.msra.mxu0 0
      %583 = vmatprep.subr.bf16.mxu0 0
      %584 = vmatpush1.bf16.msra.mxu0 0
      %585 = vmatprep.subr.bf16.mxu0 0
      %586 = vmatpush1.bf16.msra.mxu0 0
      %587 = vmatprep.subr.bf16.mxu0 0
      %588 = vmatpush1.bf16.msra.mxu0 0
      %589 = vmatprep.subr.bf16.mxu0 0
      %590 = vmatpush1.bf16.msra.mxu0 0
      %591 = vmatprep.subr.bf16.mxu0 0
      %592 = vmatpush1.bf16.msra.mxu0 0
      %593 = vmatprep.subr.bf16.mxu0 0
      %594 = vmatpush1.bf16.msra.mxu0 0
      %595 = vmatprep.subr.bf16.mxu0 0
      %596 = vmatpush1.bf16.msra.mxu0 0
      %597 = vmatprep.subr.bf16.mxu0 0
      %598 = vmatpush1.bf16.msra.mxu0 0
      %599 = vmatprep.subr.bf16.mxu0 0
      %600 = vmatpush1.bf16.msra.mxu0 0
      %601 = vmatprep.subr.bf16.mxu0 0
      %602 = vmatpush1.bf16.msra.mxu0 0
      %603 = vmatprep.subr.bf16.mxu0 0
      %604 = vmatpush1.bf16.msra.mxu0 0
      %605 = vmatprep.mubr.bf16.mxu0 0
      %606 = vmatmul.mubr.bf16.gmra.mrb[0].mxu0 %v466
      %v607 = vpop.f32.mrb[0].mxu0
      %v608 = vadd.f32 %v553, %v607
      %v609 = vpop.f32.mrb[0].mxu0
      %v610 = vpop.f32.mrb[0].mxu0
      %v611 = vadd.f32 %v553, %v610
      %v612 = vpop.f32.mrb[0].mxu0
      %613 = vmatprep.mubr.bf16.mxu0 0
      %614 = vmatmul.mubr.bf16.gmra.mrb[0].mxu0 %v469
      %v615 = vpop.f32.mrb[0].mxu0
      %v616 = vadd.f32 %v553, %v615
      %v617 = vpop.f32.mrb[0].mxu0
      %v618 = vpop.f32.mrb[0].mxu0
      %v619 = vadd.f32 %v553, %v618
      %v620 = vpop.f32.mrb[0].mxu0
      %621 = vmatprep.mubr.bf16.mxu0 0
      %622 = vmatmul.mubr.bf16.gmra.mrb[0].mxu0 %v472
      %v623 = vpop.f32.mrb[0].mxu0
      %v624 = vadd.f32 %v553, %v623
      %v625 = vpop.f32.mrb[0].mxu0
      %v626 = vpop.f32.mrb[0].mxu0
      %v627 = vadd.f32 %v553, %v626
      %v628 = vpop.f32.mrb[0].mxu0
      %629 = vmatprep.mubr.bf16.mxu0 0
      %630 = vmatmul.mubr.bf16.gmra.mrb[0].mxu0 %v475
      %v631 = vpop.f32.mrb[0].mxu0
      %v632 = vadd.f32 %v553, %v631
      %v633 = vpop.f32.mrb[0].mxu0
      %v634 = vpop.f32.mrb[0].mxu0
      %v635 = vadd.f32 %v553, %v634
      %v636 = vpop.f32.mrb[0].mxu0
      %637 = vdwg.mxu0
      %v638 = vld [vmem:[%s1] sm:$0xff]
      %v639 = vld [vmem:[%s1 + $0x8] sm:$0xff]
      %v640 = vld [vmem:[%s1 + $0x10] sm:$0xff]
      %v641 = vld [vmem:[%s1 + $0x18] sm:$0xff]
      %v642 = vld [vmem:[%s1 + $0x20] sm:$0xff]
      %v643 = vld [vmem:[%s1 + $0x28] sm:$0xff]
      %v644 = vld [vmem:[%s1 + $0x30] sm:$0xff]
      %v645 = vld [vmem:[%s1 + $0x38] sm:$0xff]
      %v646 = vld [vmem:[%s2] sm:$0xff]
      %v647 = vld [vmem:[%s2 + $0x8] sm:$0xff]
      %v648 = vld [vmem:[%s2 + $0x10] sm:$0xff]
      %v649 = vld [vmem:[%s2 + $0x18] sm:$0xff]
      %v650 = vld [vmem:[%s2 + $0x20] sm:$0xff]
      %v651 = vld [vmem:[%s2 + $0x28] sm:$0xff]
      %v652 = vld [vmem:[%s2 + $0x30] sm:$0xff]
      %v653 = vld [vmem:[%s2 + $0x38] sm:$0xff]
      %v654 = vrot.slane %v608, 7
      %v655 = vrot.slane %v611, 7
      %v656 = vrot.slane %v616, 7
      %v657 = vrot.slane %v619, 7
      %v658 = vrot.slane %v624, 7
      %v659 = vrot.slane %v627, 7
      %v660 = vrot.slane %v632, 7
      %v661 = vrot.slane %v635, 7
      %v662 = vlaneseq
      %v663 = vshrl.u32 %v662, 7
      %vm664 = vcmp.lt.s32.totalorder %v663, 1
      %v665 = vsel %vm664, %v660, %v661
      %v666 = vsel %vm664, %v659, %v660
      %v667 = vsel %vm664, %v658, %v659
      %v668 = vsel %vm664, %v657, %v658
      %v669 = vsel %vm664, %v656, %v657
      %v670 = vsel %vm664, %v655, %v656
      %v671 = vsel %vm664, %v654, %v655
      %v672 = vsel %vm664, %v661, %v654
      %vm673 = vcmp.ge.s32.totalorder %v638, 1
      %vm674 = vcmp.ge.s32.totalorder %v639, 1
      %vm675 = vcmp.ge.s32.totalorder %v640, 1
      %vm676 = vcmp.ge.s32.totalorder %v641, 1
      %vm677 = vcmp.ge.s32.totalorder %v642, 1
      %vm678 = vcmp.ge.s32.totalorder %v643, 1
      %vm679 = vcmp.ge.s32.totalorder %v644, 1
      %vm680 = vcmp.ge.s32.totalorder %v645, 1
      %vm681 = vcmp.ge.s32.totalorder %v646, 1
      %vm682 = vcmp.ge.s32.totalorder %v647, 1
      %vm683 = vcmp.ge.s32.totalorder %v648, 1
      %vm684 = vcmp.ge.s32.totalorder %v649, 1
      %vm685 = vcmp.ge.s32.totalorder %v650, 1
      %vm686 = vcmp.ge.s32.totalorder %v651, 1
      %vm687 = vcmp.ge.s32.totalorder %v652, 1
      %vm688 = vcmp.ge.s32.totalorder %v653, 1
      %vm689 = vmand %vm673, %vm681
      %vm690 = vmand %vm674, %vm682
      %vm691 = vmand %vm675, %vm683
      %vm692 = vmand %vm676, %vm684
      %vm693 = vmand %vm677, %vm685
      %vm694 = vmand %vm678, %vm686
      %vm695 = vmand %vm679, %vm687
      %vm696 = vmand %vm680, %vm688
      %v697 = vsel %vm689, 1, 0
      %v698 = vsel %vm690, 1, 0
      %v699 = vsel %vm691, 1, 0
      %v700 = vsel %vm692, 1, 0
      %v701 = vsel %vm693, 1, 0
      %v702 = vsel %vm694, 1, 0
      %v703 = vsel %vm695, 1, 0
      %v704 = vsel %vm696, 1, 0
      %705 = vset.pattern.permute.xlu0 0
      %706 = vperm.xlu0 %705, %v697
      %v707 = vpop.permute.xlu0 %706
      %708 = vset.pattern.permute.xlu0 0
      %709 = vperm.xlu0 %708, %v698
      %v710 = vpop.permute.xlu0 %709
      %711 = vset.pattern.permute.xlu0 0
      %712 = vperm.xlu0 %711, %v699
      %v713 = vpop.permute.xlu0 %712
      %714 = vset.pattern.permute.xlu0 0
      %715 = vperm.xlu0 %714, %v700
      %v716 = vpop.permute.xlu0 %715
      %717 = vset.pattern.permute.xlu0 0
      %718 = vperm.xlu0 %717, %v701
      %v719 = vpop.permute.xlu0 %718
      %720 = vset.pattern.permute.xlu0 0
      %721 = vperm.xlu0 %720, %v702
      %v722 = vpop.permute.xlu0 %721
      %723 = vset.pattern.permute.xlu0 0
      %724 = vperm.xlu0 %723, %v703
      %v725 = vpop.permute.xlu0 %724
      %726 = vset.pattern.permute.xlu0 0
      %727 = vperm.xlu0 %726, %v704
      %v728 = vpop.permute.xlu0 %727
      %vm729 = vcmp.eq.s32.totalorder %v707, 1
      %vm730 = vcmp.eq.s32.totalorder %v710, 1
      %vm731 = vcmp.eq.s32.totalorder %v713, 1
      %vm732 = vcmp.eq.s32.totalorder %v716, 1
      %vm733 = vcmp.eq.s32.totalorder %v719, 1
      %vm734 = vcmp.eq.s32.totalorder %v722, 1
      %vm735 = vcmp.eq.s32.totalorder %v725, 1
      %vm736 = vcmp.eq.s32.totalorder %v728, 1
      %v737 = vsel %vm729, %v665, 0.0
      %v738 = vsel %vm730, %v672, 0.0
      %v739 = vsel %vm731, %v671, 0.0
      %v740 = vsel %vm732, %v670, 0.0
      %v741 = vsel %vm733, %v669, 0.0
      %v742 = vsel %vm734, %v668, 0.0
      %v743 = vsel %vm735, %v667, 0.0
      %v744 = vsel %vm736, %v666, 0.0
      %v745 = vpack.c.bf16 %v738, %v737
      %v746 = vpack.c.bf16 %v740, %v739
      %v747 = vpack.c.bf16 %v742, %v741
      %v748 = vpack.c.bf16 %v744, %v743
      %v749 = vld [vmem:[%s7] sm:$0x3]
      %v750 = vsel %vm673, 1, 0
      %v751 = vsel %vm674, 1, 0
      %v752 = vsel %vm675, 1, 0
      %v753 = vsel %vm676, 1, 0
      %v754 = vsel %vm677, 1, 0
      %v755 = vsel %vm678, 1, 0
      %v756 = vsel %vm679, 1, 0
      %v757 = vsel %vm680, 1, 0
      %758 = vset.pattern.permute.xlu0 0
      %759 = vperm.xlu0 %758, %v750
      %v760 = vpop.permute.xlu0 %759
      %761 = vset.pattern.permute.xlu0 0
      %762 = vperm.xlu0 %761, %v751
      %v763 = vpop.permute.xlu0 %762
      %764 = vset.pattern.permute.xlu0 0
      %765 = vperm.xlu0 %764, %v752
      %v766 = vpop.permute.xlu0 %765
      %767 = vset.pattern.permute.xlu0 0
      %768 = vperm.xlu0 %767, %v753
      %v769 = vpop.permute.xlu0 %768
      %770 = vset.pattern.permute.xlu0 0
      %771 = vperm.xlu0 %770, %v754
      %v772 = vpop.permute.xlu0 %771
      %773 = vset.pattern.permute.xlu0 0
      %774 = vperm.xlu0 %773, %v755
      %v775 = vpop.permute.xlu0 %774
      %776 = vset.pattern.permute.xlu0 0
      %777 = vperm.xlu0 %776, %v756
      %v778 = vpop.permute.xlu0 %777
      %779 = vset.pattern.permute.xlu0 0
      %780 = vperm.xlu0 %779, %v757
      %v781 = vpop.permute.xlu0 %780
      %vm782 = vcmp.eq.s32.totalorder %v760, 1
      %vm783 = vcmp.eq.s32.totalorder %v763, 1
      %vm784 = vcmp.eq.s32.totalorder %v766, 1
      %vm785 = vcmp.eq.s32.totalorder %v769, 1
      %vm786 = vcmp.eq.s32.totalorder %v772, 1
      %vm787 = vcmp.eq.s32.totalorder %v775, 1
      %vm788 = vcmp.eq.s32.totalorder %v778, 1
      %vm789 = vcmp.eq.s32.totalorder %v781, 1
      %v790 = vsel %vm782, %v635, 0.0
      %v791 = vsel %vm783, %v608, 0.0
      %v792 = vsel %vm784, %v611, 0.0
      %v793 = vsel %vm785, %v616, 0.0
      %v794 = vsel %vm786, %v619, 0.0
      %v795 = vsel %vm787, %v624, 0.0
      %v796 = vsel %vm788, %v627, 0.0
      %v797 = vsel %vm789, %v632, 0.0
      %v798 = vpack.c.bf16 %v791, %v790
      %v799 = vpack.c.bf16 %v793, %v792
      %v800 = vpack.c.bf16 %v795, %v794
      %v801 = vpack.c.bf16 %v797, %v796
      %s802 = scalar_lea.vmem %s7, 2
      %v803 = vld [vmem:[%s802] sm:$0x3]
      %vm804 = vcmask 31744
      %v806 = vsel %vm804, %v798, 0
      %v809 = vsel %vm804, %v799, 0
      %v812 = vsel %vm804, %v800, 0
      %v815 = vsel %vm804, %v801, 0
      %vm817 = vcmask 1041408
      %v819 = vsel %vm817, %v803, 0
      %821 = vmatprep.subr.bf16.mxu0 0
      %822 = vmatpush1.bf16.msra.mxu0 %v819
      %823 = vmatprep.subr.bf16.mxu0 0
      %824 = vmatpush1.bf16.msra.mxu0 0
      %825 = vmatprep.subr.bf16.mxu0 0
      %826 = vmatpush1.bf16.msra.mxu0 0
      %827 = vmatprep.subr.bf16.mxu0 0
      %828 = vmatpush1.bf16.msra.mxu0 0
      %829 = vmatprep.subr.bf16.mxu0 0
      %830 = vmatpush1.bf16.msra.mxu0 0
      %831 = vmatprep.subr.bf16.mxu0 0
      %832 = vmatpush1.bf16.msra.mxu0 0
      %833 = vmatprep.subr.bf16.mxu0 0
      %834 = vmatpush1.bf16.msra.mxu0 0
      %835 = vmatprep.subr.bf16.mxu0 0
      %836 = vmatpush1.bf16.msra.mxu0 0
      %837 = vmatprep.subr.bf16.mxu0 0
      %838 = vmatpush1.bf16.msra.mxu0 0
      %839 = vmatprep.subr.bf16.mxu0 0
      %840 = vmatpush1.bf16.msra.mxu0 0
      %841 = vmatprep.subr.bf16.mxu0 0
      %842 = vmatpush1.bf16.msra.mxu0 0
      %843 = vmatprep.subr.bf16.mxu0 0
      %844 = vmatpush1.bf16.msra.mxu0 0
      %845 = vmatprep.subr.bf16.mxu0 0
      %846 = vmatpush1.bf16.msra.mxu0 0
      %847 = vmatprep.subr.bf16.mxu0 0
      %848 = vmatpush1.bf16.msra.mxu0 0
      %849 = vmatprep.subr.bf16.mxu0 0
      %850 = vmatpush1.bf16.msra.mxu0 0
      %851 = vmatprep.subr.bf16.mxu0 0
      %852 = vmatpush1.bf16.msra.mxu0 0
      %853 = vmatprep.mubr.bf16.mxu0 0
      %854 = vmatmul.mubr.bf16.gmra.mrb[0].mxu0 %v806
      %v855 = vpop.f32.mrb[0].mxu0
      %v856 = vadd.f32 0.0, %v855
      %v857 = vpop.f32.mrb[0].mxu0
      %v858 = vpop.f32.mrb[0].mxu0
      %v859 = vadd.f32 0.0, %v858
      %v860 = vpop.f32.mrb[0].mxu0
      %861 = vmatprep.mubr.bf16.mxu0 0
      %862 = vmatmul.mubr.bf16.gmra.mrb[0].mxu0 %v809
      %v863 = vpop.f32.mrb[0].mxu0
      %v864 = vadd.f32 0.0, %v863
      %v865 = vpop.f32.mrb[0].mxu0
      %v866 = vpop.f32.mrb[0].mxu0
      %v867 = vadd.f32 0.0, %v866
      %v868 = vpop.f32.mrb[0].mxu0
      %869 = vmatprep.mubr.bf16.mxu0 0
      %870 = vmatmul.mubr.bf16.gmra.mrb[0].mxu0 %v812
      %v871 = vpop.f32.mrb[0].mxu0
      %v872 = vadd.f32 0.0, %v871
      %v873 = vpop.f32.mrb[0].mxu0
      %v874 = vpop.f32.mrb[0].mxu0
      %v875 = vadd.f32 0.0, %v874
      %v876 = vpop.f32.mrb[0].mxu0
      %877 = vmatprep.mubr.bf16.mxu0 0
      %878 = vmatmul.mubr.bf16.gmra.mrb[0].mxu0 %v815
      %v879 = vpop.f32.mrb[0].mxu0
      %v880 = vadd.f32 0.0, %v879
      %v881 = vpop.f32.mrb[0].mxu0
      %v882 = vpop.f32.mrb[0].mxu0
      %v883 = vadd.f32 0.0, %v882
      %v884 = vpop.f32.mrb[0].mxu0
      %885 = vdwg.mxu0
      %v887 = vsel %vm804, %v745, 0
      %v890 = vsel %vm804, %v746, 0
      %v893 = vsel %vm804, %v747, 0
      %v896 = vsel %vm804, %v748, 0
      %v899 = vsel %vm817, %v749, 0
      %901 = vmatprep.subr.bf16.mxu0 0
      %902 = vmatpush1.bf16.msra.mxu0 %v899
      %903 = vmatprep.subr.bf16.mxu0 0
      %904 = vmatpush1.bf16.msra.mxu0 0
      %905 = vmatprep.subr.bf16.mxu0 0
      %906 = vmatpush1.bf16.msra.mxu0 0
      %907 = vmatprep.subr.bf16.mxu0 0
      %908 = vmatpush1.bf16.msra.mxu0 0
      %909 = vmatprep.subr.bf16.mxu0 0
      %910 = vmatpush1.bf16.msra.mxu0 0
      %911 = vmatprep.subr.bf16.mxu0 0
      %912 = vmatpush1.bf16.msra.mxu0 0
      %913 = vmatprep.subr.bf16.mxu0 0
      %914 = vmatpush1.bf16.msra.mxu0 0
      %915 = vmatprep.subr.bf16.mxu0 0
      %916 = vmatpush1.bf16.msra.mxu0 0
      %917 = vmatprep.subr.bf16.mxu0 0
      %918 = vmatpush1.bf16.msra.mxu0 0
      %919 = vmatprep.subr.bf16.mxu0 0
      %920 = vmatpush1.bf16.msra.mxu0 0
      %921 = vmatprep.subr.bf16.mxu0 0
      %922 = vmatpush1.bf16.msra.mxu0 0
      %923 = vmatprep.subr.bf16.mxu0 0
      %924 = vmatpush1.bf16.msra.mxu0 0
      %925 = vmatprep.subr.bf16.mxu0 0
      %926 = vmatpush1.bf16.msra.mxu0 0
      %927 = vmatprep.subr.bf16.mxu0 0
      %928 = vmatpush1.bf16.msra.mxu0 0
      %929 = vmatprep.subr.bf16.mxu0 0
      %930 = vmatpush1.bf16.msra.mxu0 0
      %931 = vmatprep.subr.bf16.mxu0 0
      %932 = vmatpush1.bf16.msra.mxu0 0
      %933 = vmatprep.mubr.bf16.mxu0 0
      %934 = vmatmul.mubr.bf16.gmra.mrb[0].mxu0 %v887
      %v935 = vpop.f32.mrb[0].mxu0
      %v936 = vadd.f32 %v856, %v935
      %v937 = vpop.f32.mrb[0].mxu0
      %v938 = vpop.f32.mrb[0].mxu0
      %v939 = vadd.f32 %v859, %v938
      %v940 = vpop.f32.mrb[0].mxu0
      %941 = vmatprep.mubr.bf16.mxu0 0
      %942 = vmatmul.mubr.bf16.gmra.mrb[0].mxu0 %v890
      %v943 = vpop.f32.mrb[0].mxu0
      %v944 = vadd.f32 %v864, %v943
      %v945 = vpop.f32.mrb[0].mxu0
      %v946 = vpop.f32.mrb[0].mxu0
      %v947 = vadd.f32 %v867, %v946
      %v948 = vpop.f32.mrb[0].mxu0
      %949 = vmatprep.mubr.bf16.mxu0 0
      %950 = vmatmul.mubr.bf16.gmra.mrb[0].mxu0 %v893
      %v951 = vpop.f32.mrb[0].mxu0
      %v952 = vadd.f32 %v872, %v951
      %v953 = vpop.f32.mrb[0].mxu0
      %v954 = vpop.f32.mrb[0].mxu0
      %v955 = vadd.f32 %v875, %v954
      %v956 = vpop.f32.mrb[0].mxu0
      %957 = vmatprep.mubr.bf16.mxu0 0
      %958 = vmatmul.mubr.bf16.gmra.mrb[0].mxu0 %v896
      %v959 = vpop.f32.mrb[0].mxu0
      %v960 = vadd.f32 %v880, %v959
      %v961 = vpop.f32.mrb[0].mxu0
      %v962 = vpop.f32.mrb[0].mxu0
      %v963 = vadd.f32 %v883, %v962
      %v964 = vpop.f32.mrb[0].mxu0
      %965 = vdwg.mxu0
      %v966 = vrot.slane %v608, 1
      %v967 = vrot.slane %v611, 1
      %v968 = vrot.slane %v616, 1
      %v969 = vrot.slane %v619, 1
      %v970 = vrot.slane %v624, 1
      %v971 = vrot.slane %v627, 1
      %v972 = vrot.slane %v632, 1
      %v973 = vrot.slane %v635, 1
      %vm974 = vcmp.lt.s32.totalorder %v663, 7
      %v975 = vsel %vm974, %v972, %v973
      %v976 = vsel %vm974, %v971, %v972
      %v977 = vsel %vm974, %v970, %v971
      %v978 = vsel %vm974, %v969, %v970
      %v979 = vsel %vm974, %v968, %v969
      %v980 = vsel %vm974, %v967, %v968
      %v981 = vsel %vm974, %v966, %v967
      %v982 = vsel %vm974, %v973, %v966
      %vm983 = vcmp.lt.s32.totalorder %v646, 7
      %vm984 = vcmp.lt.s32.totalorder %v647, 7
      %vm985 = vcmp.lt.s32.totalorder %v648, 7
      %vm986 = vcmp.lt.s32.totalorder %v649, 7
      %vm987 = vcmp.lt.s32.totalorder %v650, 7
      %vm988 = vcmp.lt.s32.totalorder %v651, 7
      %vm989 = vcmp.lt.s32.totalorder %v652, 7
      %vm990 = vcmp.lt.s32.totalorder %v653, 7
      %vm991 = vmand %vm673, %vm983
      %vm992 = vmand %vm674, %vm984
      %vm993 = vmand %vm675, %vm985
      %vm994 = vmand %vm676, %vm986
      %vm995 = vmand %vm677, %vm987
      %vm996 = vmand %vm678, %vm988
      %vm997 = vmand %vm679, %vm989
      %vm998 = vmand %vm680, %vm990
      %v999 = vsel %vm991, 1, 0
      %v1000 = vsel %vm992, 1, 0
      %v1001 = vsel %vm993, 1, 0
      %v1002 = vsel %vm994, 1, 0
      %v1003 = vsel %vm995, 1, 0
      %v1004 = vsel %vm996, 1, 0
      %v1005 = vsel %vm997, 1, 0
      %v1006 = vsel %vm998, 1, 0
      %1007 = vset.pattern.permute.xlu0 0
      %1008 = vperm.xlu0 %1007, %v999
      %v1009 = vpop.permute.xlu0 %1008
      %1010 = vset.pattern.permute.xlu0 0
      %1011 = vperm.xlu0 %1010, %v1000
      %v1012 = vpop.permute.xlu0 %1011
      %1013 = vset.pattern.permute.xlu0 0
      %1014 = vperm.xlu0 %1013, %v1001
      %v1015 = vpop.permute.xlu0 %1014
      %1016 = vset.pattern.permute.xlu0 0
      %1017 = vperm.xlu0 %1016, %v1002
      %v1018 = vpop.permute.xlu0 %1017
      %1019 = vset.pattern.permute.xlu0 0
      %1020 = vperm.xlu0 %1019, %v1003
      %v1021 = vpop.permute.xlu0 %1020
      %1022 = vset.pattern.permute.xlu0 0
      %1023 = vperm.xlu0 %1022, %v1004
      %v1024 = vpop.permute.xlu0 %1023
      %1025 = vset.pattern.permute.xlu0 0
      %1026 = vperm.xlu0 %1025, %v1005
      %v1027 = vpop.permute.xlu0 %1026
      %1028 = vset.pattern.permute.xlu0 0
      %1029 = vperm.xlu0 %1028, %v1006
      %v1030 = vpop.permute.xlu0 %1029
      %vm1031 = vcmp.eq.s32.totalorder %v1009, 1
      %vm1032 = vcmp.eq.s32.totalorder %v1012, 1
      %vm1033 = vcmp.eq.s32.totalorder %v1015, 1
      %vm1034 = vcmp.eq.s32.totalorder %v1018, 1
      %vm1035 = vcmp.eq.s32.totalorder %v1021, 1
      %vm1036 = vcmp.eq.s32.totalorder %v1024, 1
      %vm1037 = vcmp.eq.s32.totalorder %v1027, 1
      %vm1038 = vcmp.eq.s32.totalorder %v1030, 1
      %v1039 = vsel %vm1031, %v982, 0.0
      %v1040 = vsel %vm1032, %v981, 0.0
      %v1041 = vsel %vm1033, %v980, 0.0
      %v1042 = vsel %vm1034, %v979, 0.0
      %v1043 = vsel %vm1035, %v978, 0.0
      %v1044 = vsel %vm1036, %v977, 0.0
      %v1045 = vsel %vm1037, %v976, 0.0
      %v1046 = vsel %vm1038, %v975, 0.0
      %v1047 = vpack.c.bf16 %v1040, %v1039
      %v1048 = vpack.c.bf16 %v1042, %v1041
      %v1049 = vpack.c.bf16 %v1044, %v1043
      %v1050 = vpack.c.bf16 %v1046, %v1045
      %s1051 = scalar_lea.vmem %s7, 4
      %v1052 = vld [vmem:[%s1051] sm:$0x3]
      %v1054 = vsel %vm804, %v1047, 0
      %v1057 = vsel %vm804, %v1048, 0
      %v1060 = vsel %vm804, %v1049, 0
      %v1063 = vsel %vm804, %v1050, 0
      %v1066 = vsel %vm817, %v1052, 0
      %1068 = vmatprep.subr.bf16.mxu0 0
      %1069 = vmatpush1.bf16.msra.mxu0 %v1066
      %1070 = vmatprep.subr.bf16.mxu0 0
      %1071 = vmatpush1.bf16.msra.mxu0 0
      %1072 = vmatprep.subr.bf16.mxu0 0
      %1073 = vmatpush1.bf16.msra.mxu0 0
      %1074 = vmatprep.subr.bf16.mxu0 0
      %1075 = vmatpush1.bf16.msra.mxu0 0
      %1076 = vmatprep.subr.bf16.mxu0 0
      %1077 = vmatpush1.bf16.msra.mxu0 0
      %1078 = vmatprep.subr.bf16.mxu0 0
      %1079 = vmatpush1.bf16.msra.mxu0 0
      %1080 = vmatprep.subr.bf16.mxu0 0
      %1081 = vmatpush1.bf16.msra.mxu0 0
      %1082 = vmatprep.subr.bf16.mxu0 0
      %1083 = vmatpush1.bf16.msra.mxu0 0
      %1084 = vmatprep.subr.bf16.mxu0 0
      %1085 = vmatpush1.bf16.msra.mxu0 0
      %1086 = vmatprep.subr.bf16.mxu0 0
      %1087 = vmatpush1.bf16.msra.mxu0 0
      %1088 = vmatprep.subr.bf16.mxu0 0
      %1089 = vmatpush1.bf16.msra.mxu0 0
      %1090 = vmatprep.subr.bf16.mxu0 0
      %1091 = vmatpush1.bf16.msra.mxu0 0
      %1092 = vmatprep.subr.bf16.mxu0 0
      %1093 = vmatpush1.bf16.msra.mxu0 0
      %1094 = vmatprep.subr.bf16.mxu0 0
      %1095 = vmatpush1.bf16.msra.mxu0 0
      %1096 = vmatprep.subr.bf16.mxu0 0
      %1097 = vmatpush1.bf16.msra.mxu0 0
      %1098 = vmatprep.subr.bf16.mxu0 0
      %1099 = vmatpush1.bf16.msra.mxu0 0
      %1100 = vmatprep.mubr.bf16.mxu0 0
      %1101 = vmatmul.mubr.bf16.gmra.mrb[0].mxu0 %v1054
      %v1102 = vpop.f32.mrb[0].mxu0
      %v1103 = vadd.f32 0.0, %v1102
      %v1104 = vpop.f32.mrb[0].mxu0
      %v1105 = vpop.f32.mrb[0].mxu0
      %v1106 = vadd.f32 0.0, %v1105
      %v1107 = vpop.f32.mrb[0].mxu0
      %1108 = vmatprep.mubr.bf16.mxu0 0
      %1109 = vmatmul.mubr.bf16.gmra.mrb[0].mxu0 %v1057
      %v1110 = vpop.f32.mrb[0].mxu0
      %v1111 = vadd.f32 0.0, %v1110
      %v1112 = vpop.f32.mrb[0].mxu0
      %v1113 = vpop.f32.mrb[0].mxu0
      %v1114 = vadd.f32 0.0, %v1113
      %v1115 = vpop.f32.mrb[0].mxu0
      %1116 = vmatprep.mubr.bf16.mxu0 0
      %1117 = vmatmul.mubr.bf16.gmra.mrb[0].mxu0 %v1060
      %v1118 = vpop.f32.mrb[0].mxu0
      %v1119 = vadd.f32 0.0, %v1118
      %v1120 = vpop.f32.mrb[0].mxu0
      %v1121 = vpop.f32.mrb[0].mxu0
      %v1122 = vadd.f32 0.0, %v1121
      %v1123 = vpop.f32.mrb[0].mxu0
      %1124 = vmatprep.mubr.bf16.mxu0 0
      %1125 = vmatmul.mubr.bf16.gmra.mrb[0].mxu0 %v1063
      %v1126 = vpop.f32.mrb[0].mxu0
      %v1127 = vadd.f32 0.0, %v1126
      %v1128 = vpop.f32.mrb[0].mxu0
      %v1129 = vpop.f32.mrb[0].mxu0
      %v1130 = vadd.f32 0.0, %v1129
      %v1131 = vpop.f32.mrb[0].mxu0
      %1132 = vdwg.mxu0
      %v1133 = vadd.f32 %v936, %v1103
      %v1134 = vadd.f32 %v939, %v1106
      %v1135 = vadd.f32 %v944, %v1111
      %v1136 = vadd.f32 %v947, %v1114
      %v1137 = vadd.f32 %v952, %v1119
      %v1138 = vadd.f32 %v955, %v1122
      %v1139 = vadd.f32 %v960, %v1127
      %v1140 = vadd.f32 %v963, %v1130
      %v1141 = vsel %vm681, 1, 0
      %v1142 = vsel %vm682, 1, 0
      %v1143 = vsel %vm683, 1, 0
      %v1144 = vsel %vm684, 1, 0
      %v1145 = vsel %vm685, 1, 0
      %v1146 = vsel %vm686, 1, 0
      %v1147 = vsel %vm687, 1, 0
      %v1148 = vsel %vm688, 1, 0
      %1149 = vset.pattern.permute.xlu0 0
      %1150 = vperm.xlu0 %1149, %v1141
      %v1151 = vpop.permute.xlu0 %1150
      %1152 = vset.pattern.permute.xlu0 0
      %1153 = vperm.xlu0 %1152, %v1142
      %v1154 = vpop.permute.xlu0 %1153
      %1155 = vset.pattern.permute.xlu0 0
      %1156 = vperm.xlu0 %1155, %v1143
      %v1157 = vpop.permute.xlu0 %1156
      %1158 = vset.pattern.permute.xlu0 0
      %1159 = vperm.xlu0 %1158, %v1144
      %v1160 = vpop.permute.xlu0 %1159
      %1161 = vset.pattern.permute.xlu0 0
      %1162 = vperm.xlu0 %1161, %v1145
      %v1163 = vpop.permute.xlu0 %1162
      %1164 = vset.pattern.permute.xlu0 0
      %1165 = vperm.xlu0 %1164, %v1146
      %v1166 = vpop.permute.xlu0 %1165
      %1167 = vset.pattern.permute.xlu0 0
      %1168 = vperm.xlu0 %1167, %v1147
      %v1169 = vpop.permute.xlu0 %1168
      %1170 = vset.pattern.permute.xlu0 0
      %1171 = vperm.xlu0 %1170, %v1148
      %v1172 = vpop.permute.xlu0 %1171
      %vm1173 = vcmp.eq.s32.totalorder %v1151, 1
      %vm1174 = vcmp.eq.s32.totalorder %v1154, 1
      %vm1175 = vcmp.eq.s32.totalorder %v1157, 1
      %vm1176 = vcmp.eq.s32.totalorder %v1160, 1
      %vm1177 = vcmp.eq.s32.totalorder %v1163, 1
      %vm1178 = vcmp.eq.s32.totalorder %v1166, 1
      %vm1179 = vcmp.eq.s32.totalorder %v1169, 1
      %vm1180 = vcmp.eq.s32.totalorder %v1172, 1
      %v1181 = vsel %vm1173, %v672, 0.0
      %v1182 = vsel %vm1174, %v671, 0.0
      %v1183 = vsel %vm1175, %v670, 0.0
      %v1184 = vsel %vm1176, %v669, 0.0
      %v1185 = vsel %vm1177, %v668, 0.0
      %v1186 = vsel %vm1178, %v667, 0.0
      %v1187 = vsel %vm1179, %v666, 0.0
      %v1188 = vsel %vm1180, %v665, 0.0
      %v1189 = vpack.c.bf16 %v1182, %v1181
      %v1190 = vpack.c.bf16 %v1184, %v1183
      %v1191 = vpack.c.bf16 %v1186, %v1185
      %v1192 = vpack.c.bf16 %v1188, %v1187
      %s1193 = scalar_lea.vmem %s7, 6
      %v1194 = vld [vmem:[%s1193] sm:$0x3]
      %v1196 = vsel %vm804, %v1189, 0
      %v1199 = vsel %vm804, %v1190, 0
      %v1202 = vsel %vm804, %v1191, 0
      %v1205 = vsel %vm804, %v1192, 0
      %v1208 = vsel %vm817, %v1194, 0
      %1210 = vmatprep.subr.bf16.mxu0 0
      %1211 = vmatpush1.bf16.msra.mxu0 %v1208
      %1212 = vmatprep.subr.bf16.mxu0 0
      %1213 = vmatpush1.bf16.msra.mxu0 0
      %1214 = vmatprep.subr.bf16.mxu0 0
      %1215 = vmatpush1.bf16.msra.mxu0 0
      %1216 = vmatprep.subr.bf16.mxu0 0
      %1217 = vmatpush1.bf16.msra.mxu0 0
      %1218 = vmatprep.subr.bf16.mxu0 0
      %1219 = vmatpush1.bf16.msra.mxu0 0
      %1220 = vmatprep.subr.bf16.mxu0 0
      %1221 = vmatpush1.bf16.msra.mxu0 0
      %1222 = vmatprep.subr.bf16.mxu0 0
      %1223 = vmatpush1.bf16.msra.mxu0 0
      %1224 = vmatprep.subr.bf16.mxu0 0
      %1225 = vmatpush1.bf16.msra.mxu0 0
      %1226 = vmatprep.subr.bf16.mxu0 0
      %1227 = vmatpush1.bf16.msra.mxu0 0
      %1228 = vmatprep.subr.bf16.mxu0 0
      %1229 = vmatpush1.bf16.msra.mxu0 0
      %1230 = vmatprep.subr.bf16.mxu0 0
      %1231 = vmatpush1.bf16.msra.mxu0 0
      %1232 = vmatprep.subr.bf16.mxu0 0
      %1233 = vmatpush1.bf16.msra.mxu0 0
      %1234 = vmatprep.subr.bf16.mxu0 0
      %1235 = vmatpush1.bf16.msra.mxu0 0
      %1236 = vmatprep.subr.bf16.mxu0 0
      %1237 = vmatpush1.bf16.msra.mxu0 0
      %1238 = vmatprep.subr.bf16.mxu0 0
      %1239 = vmatpush1.bf16.msra.mxu0 0
      %1240 = vmatprep.subr.bf16.mxu0 0
      %1241 = vmatpush1.bf16.msra.mxu0 0
      %1242 = vmatprep.mubr.bf16.mxu0 0
      %1243 = vmatmul.mubr.bf16.gmra.mrb[0].mxu0 %v1196
      %v1244 = vpop.f32.mrb[0].mxu0
      %v1245 = vadd.f32 0.0, %v1244
      %v1246 = vpop.f32.mrb[0].mxu0
      %v1247 = vpop.f32.mrb[0].mxu0
      %v1248 = vadd.f32 0.0, %v1247
      %v1249 = vpop.f32.mrb[0].mxu0
      %1250 = vmatprep.mubr.bf16.mxu0 0
      %1251 = vmatmul.mubr.bf16.gmra.mrb[0].mxu0 %v1199
      %v1252 = vpop.f32.mrb[0].mxu0
      %v1253 = vadd.f32 0.0, %v1252
      %v1254 = vpop.f32.mrb[0].mxu0
      %v1255 = vpop.f32.mrb[0].mxu0
      %v1256 = vadd.f32 0.0, %v1255
      %v1257 = vpop.f32.mrb[0].mxu0
      %1258 = vmatprep.mubr.bf16.mxu0 0
      %1259 = vmatmul.mubr.bf16.gmra.mrb[0].mxu0 %v1202
      %v1260 = vpop.f32.mrb[0].mxu0
      %v1261 = vadd.f32 0.0, %v1260
      %v1262 = vpop.f32.mrb[0].mxu0
      %v1263 = vpop.f32.mrb[0].mxu0
      %v1264 = vadd.f32 0.0, %v1263
      %v1265 = vpop.f32.mrb[0].mxu0
      %1266 = vmatprep.mubr.bf16.mxu0 0
      %1267 = vmatmul.mubr.bf16.gmra.mrb[0].mxu0 %v1205
      %v1268 = vpop.f32.mrb[0].mxu0
      %v1269 = vadd.f32 0.0, %v1268
      %v1270 = vpop.f32.mrb[0].mxu0
      %v1271 = vpop.f32.mrb[0].mxu0
      %v1272 = vadd.f32 0.0, %v1271
      %v1273 = vpop.f32.mrb[0].mxu0
      %1274 = vdwg.mxu0
      %v1275 = vadd.f32 %v1133, %v1245
      %v1276 = vadd.f32 %v1134, %v1248
      %v1277 = vadd.f32 %v1135, %v1253
      %v1278 = vadd.f32 %v1136, %v1256
      %v1279 = vadd.f32 %v1137, %v1261
      %v1280 = vadd.f32 %v1138, %v1264
      %v1281 = vadd.f32 %v1139, %v1269
      %v1282 = vadd.f32 %v1140, %v1272
      %v1283 = vpack.c.bf16 %v611, %v608
      %v1284 = vpack.c.bf16 %v619, %v616
      %v1285 = vpack.c.bf16 %v627, %v624
      %v1286 = vpack.c.bf16 %v635, %v632
      %s1287 = scalar_lea.vmem %s7, 8
      %v1288 = vld [vmem:[%s1287] sm:$0x3]
      %v1290 = vsel %vm804, %v1283, 0
      %v1293 = vsel %vm804, %v1284, 0
      %v1296 = vsel %vm804, %v1285, 0
      %v1299 = vsel %vm804, %v1286, 0
      %v1302 = vsel %vm817, %v1288, 0
      %1304 = vmatprep.subr.bf16.mxu0 0
      %1305 = vmatpush1.bf16.msra.mxu0 %v1302
      %1306 = vmatprep.subr.bf16.mxu0 0
      %1307 = vmatpush1.bf16.msra.mxu0 0
      %1308 = vmatprep.subr.bf16.mxu0 0
      %1309 = vmatpush1.bf16.msra.mxu0 0
      %1310 = vmatprep.subr.bf16.mxu0 0
      %1311 = vmatpush1.bf16.msra.mxu0 0
      %1312 = vmatprep.subr.bf16.mxu0 0
      %1313 = vmatpush1.bf16.msra.mxu0 0
      %1314 = vmatprep.subr.bf16.mxu0 0
      %1315 = vmatpush1.bf16.msra.mxu0 0
      %1316 = vmatprep.subr.bf16.mxu0 0
      %1317 = vmatpush1.bf16.msra.mxu0 0
      %1318 = vmatprep.subr.bf16.mxu0 0
      %1319 = vmatpush1.bf16.msra.mxu0 0
      %1320 = vmatprep.subr.bf16.mxu0 0
      %1321 = vmatpush1.bf16.msra.mxu0 0
      %1322 = vmatprep.subr.bf16.mxu0 0
      %1323 = vmatpush1.bf16.msra.mxu0 0
      %1324 = vmatprep.subr.bf16.mxu0 0
      %1325 = vmatpush1.bf16.msra.mxu0 0
      %1326 = vmatprep.subr.bf16.mxu0 0
      %1327 = vmatpush1.bf16.msra.mxu0 0
      %1328 = vmatprep.subr.bf16.mxu0 0
      %1329 = vmatpush1.bf16.msra.mxu0 0
      %1330 = vmatprep.subr.bf16.mxu0 0
      %1331 = vmatpush1.bf16.msra.mxu0 0
      %1332 = vmatprep.subr.bf16.mxu0 0
      %1333 = vmatpush1.bf16.msra.mxu0 0
      %1334 = vmatprep.subr.bf16.mxu0 0
      %1335 = vmatpush1.bf16.msra.mxu0 0
      %1336 = vmatprep.mubr.bf16.mxu0 0
      %1337 = vmatmul.mubr.bf16.gmra.mrb[0].mxu0 %v1290
      %v1338 = vpop.f32.mrb[0].mxu0
      %v1339 = vadd.f32 0.0, %v1338
      %v1340 = vpop.f32.mrb[0].mxu0
      %v1341 = vpop.f32.mrb[0].mxu0
      %v1342 = vadd.f32 0.0, %v1341
      %v1343 = vpop.f32.mrb[0].mxu0
      %1344 = vmatprep.mubr.bf16.mxu0 0
      %1345 = vmatmul.mubr.bf16.gmra.mrb[0].mxu0 %v1293
      %v1346 = vpop.f32.mrb[0].mxu0
      %v1347 = vadd.f32 0.0, %v1346
      %v1348 = vpop.f32.mrb[0].mxu0
      %v1349 = vpop.f32.mrb[0].mxu0
      %v1350 = vadd.f32 0.0, %v1349
      %v1351 = vpop.f32.mrb[0].mxu0
      %1352 = vmatprep.mubr.bf16.mxu0 0
      %1353 = vmatmul.mubr.bf16.gmra.mrb[0].mxu0 %v1296
      %v1354 = vpop.f32.mrb[0].mxu0
      %v1355 = vadd.f32 0.0, %v1354
      %v1356 = vpop.f32.mrb[0].mxu0
      %v1357 = vpop.f32.mrb[0].mxu0
      %v1358 = vadd.f32 0.0, %v1357
      %v1359 = vpop.f32.mrb[0].mxu0
      %1360 = vmatprep.mubr.bf16.mxu0 0
      %1361 = vmatmul.mubr.bf16.gmra.mrb[0].mxu0 %v1299
      %v1362 = vpop.f32.mrb[0].mxu0
      %v1363 = vadd.f32 0.0, %v1362
      %v1364 = vpop.f32.mrb[0].mxu0
      %v1365 = vpop.f32.mrb[0].mxu0
      %v1366 = vadd.f32 0.0, %v1365
      %v1367 = vpop.f32.mrb[0].mxu0
      %1368 = vdwg.mxu0
      %v1369 = vadd.f32 %v1275, %v1339
      %v1370 = vadd.f32 %v1276, %v1342
      %v1371 = vadd.f32 %v1277, %v1347
      %v1372 = vadd.f32 %v1278, %v1350
      %v1373 = vadd.f32 %v1279, %v1355
      %v1374 = vadd.f32 %v1280, %v1358
      %v1375 = vadd.f32 %v1281, %v1363
      %v1376 = vadd.f32 %v1282, %v1366
      %v1377 = vsel %vm983, 1, 0
      %v1378 = vsel %vm984, 1, 0
      %v1379 = vsel %vm985, 1, 0
      %v1380 = vsel %vm986, 1, 0
      %v1381 = vsel %vm987, 1, 0
      %v1382 = vsel %vm988, 1, 0
      %v1383 = vsel %vm989, 1, 0
      %v1384 = vsel %vm990, 1, 0
      %1385 = vset.pattern.permute.xlu0 0
      %1386 = vperm.xlu0 %1385, %v1377
      %v1387 = vpop.permute.xlu0 %1386
      %1388 = vset.pattern.permute.xlu0 0
      %1389 = vperm.xlu0 %1388, %v1378
      %v1390 = vpop.permute.xlu0 %1389
      %1391 = vset.pattern.permute.xlu0 0
      %1392 = vperm.xlu0 %1391, %v1379
      %v1393 = vpop.permute.xlu0 %1392
      %1394 = vset.pattern.permute.xlu0 0
      %1395 = vperm.xlu0 %1394, %v1380
      %v1396 = vpop.permute.xlu0 %1395
      %1397 = vset.pattern.permute.xlu0 0
      %1398 = vperm.xlu0 %1397, %v1381
      %v1399 = vpop.permute.xlu0 %1398
      %1400 = vset.pattern.permute.xlu0 0
      %1401 = vperm.xlu0 %1400, %v1382
      %v1402 = vpop.permute.xlu0 %1401
      %1403 = vset.pattern.permute.xlu0 0
      %1404 = vperm.xlu0 %1403, %v1383
      %v1405 = vpop.permute.xlu0 %1404
      %1406 = vset.pattern.permute.xlu0 0
      %1407 = vperm.xlu0 %1406, %v1384
      %v1408 = vpop.permute.xlu0 %1407
      %vm1409 = vcmp.eq.s32.totalorder %v1387, 1
      %vm1410 = vcmp.eq.s32.totalorder %v1390, 1
      %vm1411 = vcmp.eq.s32.totalorder %v1393, 1
      %vm1412 = vcmp.eq.s32.totalorder %v1396, 1
      %vm1413 = vcmp.eq.s32.totalorder %v1399, 1
      %vm1414 = vcmp.eq.s32.totalorder %v1402, 1
      %vm1415 = vcmp.eq.s32.totalorder %v1405, 1
      %vm1416 = vcmp.eq.s32.totalorder %v1408, 1
      %v1417 = vsel %vm1409, %v981, 0.0
      %v1418 = vsel %vm1410, %v980, 0.0
      %v1419 = vsel %vm1411, %v979, 0.0
      %v1420 = vsel %vm1412, %v978, 0.0
      %v1421 = vsel %vm1413, %v977, 0.0
      %v1422 = vsel %vm1414, %v976, 0.0
      %v1423 = vsel %vm1415, %v975, 0.0
      %v1424 = vsel %vm1416, %v982, 0.0
      %v1425 = vpack.c.bf16 %v1418, %v1417
      %v1426 = vpack.c.bf16 %v1420, %v1419
      %v1427 = vpack.c.bf16 %v1422, %v1421
      %v1428 = vpack.c.bf16 %v1424, %v1423
      %s1429 = scalar_lea.vmem %s7, 10
      %v1430 = vld [vmem:[%s1429] sm:$0x3]
      %v1432 = vsel %vm804, %v1425, 0
      %v1435 = vsel %vm804, %v1426, 0
      %v1438 = vsel %vm804, %v1427, 0
      %v1441 = vsel %vm804, %v1428, 0
      %v1444 = vsel %vm817, %v1430, 0
      %1446 = vmatprep.subr.bf16.mxu0 0
      %1447 = vmatpush1.bf16.msra.mxu0 %v1444
      %1448 = vmatprep.subr.bf16.mxu0 0
      %1449 = vmatpush1.bf16.msra.mxu0 0
      %1450 = vmatprep.subr.bf16.mxu0 0
      %1451 = vmatpush1.bf16.msra.mxu0 0
      %1452 = vmatprep.subr.bf16.mxu0 0
      %1453 = vmatpush1.bf16.msra.mxu0 0
      %1454 = vmatprep.subr.bf16.mxu0 0
      %1455 = vmatpush1.bf16.msra.mxu0 0
      %1456 = vmatprep.subr.bf16.mxu0 0
      %1457 = vmatpush1.bf16.msra.mxu0 0
      %1458 = vmatprep.subr.bf16.mxu0 0
      %1459 = vmatpush1.bf16.msra.mxu0 0
      %1460 = vmatprep.subr.bf16.mxu0 0
      %1461 = vmatpush1.bf16.msra.mxu0 0
      %1462 = vmatprep.subr.bf16.mxu0 0
      %1463 = vmatpush1.bf16.msra.mxu0 0
      %1464 = vmatprep.subr.bf16.mxu0 0
      %1465 = vmatpush1.bf16.msra.mxu0 0
      %1466 = vmatprep.subr.bf16.mxu0 0
      %1467 = vmatpush1.bf16.msra.mxu0 0
      %1468 = vmatprep.subr.bf16.mxu0 0
      %1469 = vmatpush1.bf16.msra.mxu0 0
      %1470 = vmatprep.subr.bf16.mxu0 0
      %1471 = vmatpush1.bf16.msra.mxu0 0
      %1472 = vmatprep.subr.bf16.mxu0 0
      %1473 = vmatpush1.bf16.msra.mxu0 0
      %1474 = vmatprep.subr.bf16.mxu0 0
      %1475 = vmatpush1.bf16.msra.mxu0 0
      %1476 = vmatprep.subr.bf16.mxu0 0
      %1477 = vmatpush1.bf16.msra.mxu0 0
      %1478 = vmatprep.mubr.bf16.mxu0 0
      %1479 = vmatmul.mubr.bf16.gmra.mrb[0].mxu0 %v1432
      %v1480 = vpop.f32.mrb[0].mxu0
      %v1481 = vadd.f32 0.0, %v1480
      %v1482 = vpop.f32.mrb[0].mxu0
      %v1483 = vpop.f32.mrb[0].mxu0
      %v1484 = vadd.f32 0.0, %v1483
      %v1485 = vpop.f32.mrb[0].mxu0
      %1486 = vmatprep.mubr.bf16.mxu0 0
      %1487 = vmatmul.mubr.bf16.gmra.mrb[0].mxu0 %v1435
      %v1488 = vpop.f32.mrb[0].mxu0
      %v1489 = vadd.f32 0.0, %v1488
      %v1490 = vpop.f32.mrb[0].mxu0
      %v1491 = vpop.f32.mrb[0].mxu0
      %v1492 = vadd.f32 0.0, %v1491
      %v1493 = vpop.f32.mrb[0].mxu0
      %1494 = vmatprep.mubr.bf16.mxu0 0
      %1495 = vmatmul.mubr.bf16.gmra.mrb[0].mxu0 %v1438
      %v1496 = vpop.f32.mrb[0].mxu0
      %v1497 = vadd.f32 0.0, %v1496
      %v1498 = vpop.f32.mrb[0].mxu0
      %v1499 = vpop.f32.mrb[0].mxu0
      %v1500 = vadd.f32 0.0, %v1499
      %v1501 = vpop.f32.mrb[0].mxu0
      %1502 = vmatprep.mubr.bf16.mxu0 0
      %1503 = vmatmul.mubr.bf16.gmra.mrb[0].mxu0 %v1441
      %v1504 = vpop.f32.mrb[0].mxu0
      %v1505 = vadd.f32 0.0, %v1504
      %v1506 = vpop.f32.mrb[0].mxu0
      %v1507 = vpop.f32.mrb[0].mxu0
      %v1508 = vadd.f32 0.0, %v1507
      %v1509 = vpop.f32.mrb[0].mxu0
      %1510 = vdwg.mxu0
      %v1511 = vadd.f32 %v1369, %v1481
      %v1512 = vadd.f32 %v1370, %v1484
      %v1513 = vadd.f32 %v1371, %v1489
      %v1514 = vadd.f32 %v1372, %v1492
      %v1515 = vadd.f32 %v1373, %v1497
      %v1516 = vadd.f32 %v1374, %v1500
      %v1517 = vadd.f32 %v1375, %v1505
      %v1518 = vadd.f32 %v1376, %v1508
      %vm1519 = vcmp.lt.s32.totalorder %v638, 7
      %vm1520 = vcmp.lt.s32.totalorder %v639, 7
      %vm1521 = vcmp.lt.s32.totalorder %v640, 7
      %vm1522 = vcmp.lt.s32.totalorder %v641, 7
      %vm1523 = vcmp.lt.s32.totalorder %v642, 7
      %vm1524 = vcmp.lt.s32.totalorder %v643, 7
      %vm1525 = vcmp.lt.s32.totalorder %v644, 7
      %vm1526 = vcmp.lt.s32.totalorder %v645, 7
      %vm1527 = vmand %vm1519, %vm681
      %vm1528 = vmand %vm1520, %vm682
      %vm1529 = vmand %vm1521, %vm683
      %vm1530 = vmand %vm1522, %vm684
      %vm1531 = vmand %vm1523, %vm685
      %vm1532 = vmand %vm1524, %vm686
      %vm1533 = vmand %vm1525, %vm687
      %vm1534 = vmand %vm1526, %vm688
      %v1535 = vsel %vm1527, 1, 0
      %v1536 = vsel %vm1528, 1, 0
      %v1537 = vsel %vm1529, 1, 0
      %v1538 = vsel %vm1530, 1, 0
      %v1539 = vsel %vm1531, 1, 0
      %v1540 = vsel %vm1532, 1, 0
      %v1541 = vsel %vm1533, 1, 0
      %v1542 = vsel %vm1534, 1, 0
      %1543 = vset.pattern.permute.xlu0 0
      %1544 = vperm.xlu0 %1543, %v1535
      %v1545 = vpop.permute.xlu0 %1544
      %1546 = vset.pattern.permute.xlu0 0
      %1547 = vperm.xlu0 %1546, %v1536
      %v1548 = vpop.permute.xlu0 %1547
      %1549 = vset.pattern.permute.xlu0 0
      %1550 = vperm.xlu0 %1549, %v1537
      %v1551 = vpop.permute.xlu0 %1550
      %1552 = vset.pattern.permute.xlu0 0
      %1553 = vperm.xlu0 %1552, %v1538
      %v1554 = vpop.permute.xlu0 %1553
      %1555 = vset.pattern.permute.xlu0 0
      %1556 = vperm.xlu0 %1555, %v1539
      %v1557 = vpop.permute.xlu0 %1556
      %1558 = vset.pattern.permute.xlu0 0
      %1559 = vperm.xlu0 %1558, %v1540
      %v1560 = vpop.permute.xlu0 %1559
      %1561 = vset.pattern.permute.xlu0 0
      %1562 = vperm.xlu0 %1561, %v1541
      %v1563 = vpop.permute.xlu0 %1562
      %1564 = vset.pattern.permute.xlu0 0
      %1565 = vperm.xlu0 %1564, %v1542
      %v1566 = vpop.permute.xlu0 %1565
      %vm1567 = vcmp.eq.s32.totalorder %v1545, 1
      %vm1568 = vcmp.eq.s32.totalorder %v1548, 1
      %vm1569 = vcmp.eq.s32.totalorder %v1551, 1
      %vm1570 = vcmp.eq.s32.totalorder %v1554, 1
      %vm1571 = vcmp.eq.s32.totalorder %v1557, 1
      %vm1572 = vcmp.eq.s32.totalorder %v1560, 1
      %vm1573 = vcmp.eq.s32.totalorder %v1563, 1
      %vm1574 = vcmp.eq.s32.totalorder %v1566, 1
      %v1575 = vsel %vm1567, %v671, 0.0
      %v1576 = vsel %vm1568, %v670, 0.0
      %v1577 = vsel %vm1569, %v669, 0.0
      %v1578 = vsel %vm1570, %v668, 0.0
      %v1579 = vsel %vm1571, %v667, 0.0
      %v1580 = vsel %vm1572, %v666, 0.0
      %v1581 = vsel %vm1573, %v665, 0.0
      %v1582 = vsel %vm1574, %v672, 0.0
      %v1583 = vpack.c.bf16 %v1576, %v1575
      %v1584 = vpack.c.bf16 %v1578, %v1577
      %v1585 = vpack.c.bf16 %v1580, %v1579
      %v1586 = vpack.c.bf16 %v1582, %v1581
      %s1587 = scalar_lea.vmem %s7, 12
      %v1588 = vld [vmem:[%s1587] sm:$0x3]
      %v1590 = vsel %vm804, %v1583, 0
      %v1593 = vsel %vm804, %v1584, 0
      %v1596 = vsel %vm804, %v1585, 0
      %v1599 = vsel %vm804, %v1586, 0
      %v1602 = vsel %vm817, %v1588, 0
      %1604 = vmatprep.subr.bf16.mxu0 0
      %1605 = vmatpush1.bf16.msra.mxu0 %v1602
      %1606 = vmatprep.subr.bf16.mxu0 0
      %1607 = vmatpush1.bf16.msra.mxu0 0
      %1608 = vmatprep.subr.bf16.mxu0 0
      %1609 = vmatpush1.bf16.msra.mxu0 0
      %1610 = vmatprep.subr.bf16.mxu0 0
      %1611 = vmatpush1.bf16.msra.mxu0 0
      %1612 = vmatprep.subr.bf16.mxu0 0
      %1613 = vmatpush1.bf16.msra.mxu0 0
      %1614 = vmatprep.subr.bf16.mxu0 0
      %1615 = vmatpush1.bf16.msra.mxu0 0
      %1616 = vmatprep.subr.bf16.mxu0 0
      %1617 = vmatpush1.bf16.msra.mxu0 0
      %1618 = vmatprep.subr.bf16.mxu0 0
      %1619 = vmatpush1.bf16.msra.mxu0 0
      %1620 = vmatprep.subr.bf16.mxu0 0
      %1621 = vmatpush1.bf16.msra.mxu0 0
      %1622 = vmatprep.subr.bf16.mxu0 0
      %1623 = vmatpush1.bf16.msra.mxu0 0
      %1624 = vmatprep.subr.bf16.mxu0 0
      %1625 = vmatpush1.bf16.msra.mxu0 0
      %1626 = vmatprep.subr.bf16.mxu0 0
      %1627 = vmatpush1.bf16.msra.mxu0 0
      %1628 = vmatprep.subr.bf16.mxu0 0
      %1629 = vmatpush1.bf16.msra.mxu0 0
      %1630 = vmatprep.subr.bf16.mxu0 0
      %1631 = vmatpush1.bf16.msra.mxu0 0
      %1632 = vmatprep.subr.bf16.mxu0 0
      %1633 = vmatpush1.bf16.msra.mxu0 0
      %1634 = vmatprep.subr.bf16.mxu0 0
      %1635 = vmatpush1.bf16.msra.mxu0 0
      %1636 = vmatprep.mubr.bf16.mxu0 0
      %1637 = vmatmul.mubr.bf16.gmra.mrb[0].mxu0 %v1590
      %v1638 = vpop.f32.mrb[0].mxu0
      %v1639 = vadd.f32 0.0, %v1638
      %v1640 = vpop.f32.mrb[0].mxu0
      %v1641 = vpop.f32.mrb[0].mxu0
      %v1642 = vadd.f32 0.0, %v1641
      %v1643 = vpop.f32.mrb[0].mxu0
      %1644 = vmatprep.mubr.bf16.mxu0 0
      %1645 = vmatmul.mubr.bf16.gmra.mrb[0].mxu0 %v1593
      %v1646 = vpop.f32.mrb[0].mxu0
      %v1647 = vadd.f32 0.0, %v1646
      %v1648 = vpop.f32.mrb[0].mxu0
      %v1649 = vpop.f32.mrb[0].mxu0
      %v1650 = vadd.f32 0.0, %v1649
      %v1651 = vpop.f32.mrb[0].mxu0
      %1652 = vmatprep.mubr.bf16.mxu0 0
      %1653 = vmatmul.mubr.bf16.gmra.mrb[0].mxu0 %v1596
      %v1654 = vpop.f32.mrb[0].mxu0
      %v1655 = vadd.f32 0.0, %v1654
      %v1656 = vpop.f32.mrb[0].mxu0
      %v1657 = vpop.f32.mrb[0].mxu0
      %v1658 = vadd.f32 0.0, %v1657
      %v1659 = vpop.f32.mrb[0].mxu0
      %1660 = vmatprep.mubr.bf16.mxu0 0
      %1661 = vmatmul.mubr.bf16.gmra.mrb[0].mxu0 %v1599
      %v1662 = vpop.f32.mrb[0].mxu0
      %v1663 = vadd.f32 0.0, %v1662
      %v1664 = vpop.f32.mrb[0].mxu0
      %v1665 = vpop.f32.mrb[0].mxu0
      %v1666 = vadd.f32 0.0, %v1665
      %v1667 = vpop.f32.mrb[0].mxu0
      %1668 = vdwg.mxu0
      %v1669 = vadd.f32 %v1511, %v1639
      %v1670 = vadd.f32 %v1512, %v1642
      %v1671 = vadd.f32 %v1513, %v1647
      %v1672 = vadd.f32 %v1514, %v1650
      %v1673 = vadd.f32 %v1515, %v1655
      %v1674 = vadd.f32 %v1516, %v1658
      %v1675 = vadd.f32 %v1517, %v1663
      %v1676 = vadd.f32 %v1518, %v1666
      %v1677 = vsel %vm1519, 1, 0
      %v1678 = vsel %vm1520, 1, 0
      %v1679 = vsel %vm1521, 1, 0
      %v1680 = vsel %vm1522, 1, 0
      %v1681 = vsel %vm1523, 1, 0
      %v1682 = vsel %vm1524, 1, 0
      %v1683 = vsel %vm1525, 1, 0
      %v1684 = vsel %vm1526, 1, 0
      %1685 = vset.pattern.permute.xlu0 0
      %1686 = vperm.xlu0 %1685, %v1677
      %v1687 = vpop.permute.xlu0 %1686
      %1688 = vset.pattern.permute.xlu0 0
      %1689 = vperm.xlu0 %1688, %v1678
      %v1690 = vpop.permute.xlu0 %1689
      %1691 = vset.pattern.permute.xlu0 0
      %1692 = vperm.xlu0 %1691, %v1679
      %v1693 = vpop.permute.xlu0 %1692
      %1694 = vset.pattern.permute.xlu0 0
      %1695 = vperm.xlu0 %1694, %v1680
      %v1696 = vpop.permute.xlu0 %1695
      %1697 = vset.pattern.permute.xlu0 0
      %1698 = vperm.xlu0 %1697, %v1681
      %v1699 = vpop.permute.xlu0 %1698
      %1700 = vset.pattern.permute.xlu0 0
      %1701 = vperm.xlu0 %1700, %v1682
      %v1702 = vpop.permute.xlu0 %1701
      %1703 = vset.pattern.permute.xlu0 0
      %1704 = vperm.xlu0 %1703, %v1683
      %v1705 = vpop.permute.xlu0 %1704
      %1706 = vset.pattern.permute.xlu0 0
      %1707 = vperm.xlu0 %1706, %v1684
      %v1708 = vpop.permute.xlu0 %1707
      %vm1709 = vcmp.eq.s32.totalorder %v1687, 1
      %vm1710 = vcmp.eq.s32.totalorder %v1690, 1
      %vm1711 = vcmp.eq.s32.totalorder %v1693, 1
      %vm1712 = vcmp.eq.s32.totalorder %v1696, 1
      %vm1713 = vcmp.eq.s32.totalorder %v1699, 1
      %vm1714 = vcmp.eq.s32.totalorder %v1702, 1
      %vm1715 = vcmp.eq.s32.totalorder %v1705, 1
      %vm1716 = vcmp.eq.s32.totalorder %v1708, 1
      %v1717 = vsel %vm1709, %v611, 0.0
      %v1718 = vsel %vm1710, %v616, 0.0
      %v1719 = vsel %vm1711, %v619, 0.0
      %v1720 = vsel %vm1712, %v624, 0.0
      %v1721 = vsel %vm1713, %v627, 0.0
      %v1722 = vsel %vm1714, %v632, 0.0
      %v1723 = vsel %vm1715, %v635, 0.0
      %v1724 = vsel %vm1716, %v608, 0.0
      %v1725 = vpack.c.bf16 %v1718, %v1717
      %v1726 = vpack.c.bf16 %v1720, %v1719
      %v1727 = vpack.c.bf16 %v1722, %v1721
      %v1728 = vpack.c.bf16 %v1724, %v1723
      %s1729 = scalar_lea.vmem %s7, 14
      %v1730 = vld [vmem:[%s1729] sm:$0x3]
      %v1732 = vsel %vm804, %v1725, 0
      %v1735 = vsel %vm804, %v1726, 0
      %v1738 = vsel %vm804, %v1727, 0
      %v1741 = vsel %vm804, %v1728, 0
      %v1744 = vsel %vm817, %v1730, 0
      %1746 = vmatprep.subr.bf16.mxu0 0
      %1747 = vmatpush1.bf16.msra.mxu0 %v1744
      %1748 = vmatprep.subr.bf16.mxu0 0
      %1749 = vmatpush1.bf16.msra.mxu0 0
      %1750 = vmatprep.subr.bf16.mxu0 0
      %1751 = vmatpush1.bf16.msra.mxu0 0
      %1752 = vmatprep.subr.bf16.mxu0 0
      %1753 = vmatpush1.bf16.msra.mxu0 0
      %1754 = vmatprep.subr.bf16.mxu0 0
      %1755 = vmatpush1.bf16.msra.mxu0 0
      %1756 = vmatprep.subr.bf16.mxu0 0
      %1757 = vmatpush1.bf16.msra.mxu0 0
      %1758 = vmatprep.subr.bf16.mxu0 0
      %1759 = vmatpush1.bf16.msra.mxu0 0
      %1760 = vmatprep.subr.bf16.mxu0 0
      %1761 = vmatpush1.bf16.msra.mxu0 0
      %1762 = vmatprep.subr.bf16.mxu0 0
      %1763 = vmatpush1.bf16.msra.mxu0 0
      %1764 = vmatprep.subr.bf16.mxu0 0
      %1765 = vmatpush1.bf16.msra.mxu0 0
      %1766 = vmatprep.subr.bf16.mxu0 0
      %1767 = vmatpush1.bf16.msra.mxu0 0
      %1768 = vmatprep.subr.bf16.mxu0 0
      %1769 = vmatpush1.bf16.msra.mxu0 0
      %1770 = vmatprep.subr.bf16.mxu0 0
      %1771 = vmatpush1.bf16.msra.mxu0 0
      %1772 = vmatprep.subr.bf16.mxu0 0
      %1773 = vmatpush1.bf16.msra.mxu0 0
      %1774 = vmatprep.subr.bf16.mxu0 0
      %1775 = vmatpush1.bf16.msra.mxu0 0
      %1776 = vmatprep.subr.bf16.mxu0 0
      %1777 = vmatpush1.bf16.msra.mxu0 0
      %1778 = vmatprep.mubr.bf16.mxu0 0
      %1779 = vmatmul.mubr.bf16.gmra.mrb[0].mxu0 %v1732
      %v1780 = vpop.f32.mrb[0].mxu0
      %v1781 = vadd.f32 0.0, %v1780
      %v1782 = vpop.f32.mrb[0].mxu0
      %v1783 = vpop.f32.mrb[0].mxu0
      %v1784 = vadd.f32 0.0, %v1783
      %v1785 = vpop.f32.mrb[0].mxu0
      %1786 = vmatprep.mubr.bf16.mxu0 0
      %1787 = vmatmul.mubr.bf16.gmra.mrb[0].mxu0 %v1735
      %v1788 = vpop.f32.mrb[0].mxu0
      %v1789 = vadd.f32 0.0, %v1788
      %v1790 = vpop.f32.mrb[0].mxu0
      %v1791 = vpop.f32.mrb[0].mxu0
      %v1792 = vadd.f32 0.0, %v1791
      %v1793 = vpop.f32.mrb[0].mxu0
      %1794 = vmatprep.mubr.bf16.mxu0 0
      %1795 = vmatmul.mubr.bf16.gmra.mrb[0].mxu0 %v1738
      %v1796 = vpop.f32.mrb[0].mxu0
      %v1797 = vadd.f32 0.0, %v1796
      %v1798 = vpop.f32.mrb[0].mxu0
      %v1799 = vpop.f32.mrb[0].mxu0
      %v1800 = vadd.f32 0.0, %v1799
      %v1801 = vpop.f32.mrb[0].mxu0
      %1802 = vmatprep.mubr.bf16.mxu0 0
      %1803 = vmatmul.mubr.bf16.gmra.mrb[0].mxu0 %v1741
      %v1804 = vpop.f32.mrb[0].mxu0
      %v1805 = vadd.f32 0.0, %v1804
      %v1806 = vpop.f32.mrb[0].mxu0
      %v1807 = vpop.f32.mrb[0].mxu0
      %v1808 = vadd.f32 0.0, %v1807
      %v1809 = vpop.f32.mrb[0].mxu0
      %1810 = vdwg.mxu0
      %v1811 = vadd.f32 %v1669, %v1781
      %v1812 = vadd.f32 %v1670, %v1784
      %v1813 = vadd.f32 %v1671, %v1789
      %v1814 = vadd.f32 %v1672, %v1792
      %v1815 = vadd.f32 %v1673, %v1797
      %v1816 = vadd.f32 %v1674, %v1800
      %v1817 = vadd.f32 %v1675, %v1805
      %v1818 = vadd.f32 %v1676, %v1808
      %vm1819 = vmand %vm1519, %vm983
      %vm1820 = vmand %vm1520, %vm984
      %vm1821 = vmand %vm1521, %vm985
      %vm1822 = vmand %vm1522, %vm986
      %vm1823 = vmand %vm1523, %vm987
      %vm1824 = vmand %vm1524, %vm988
      %vm1825 = vmand %vm1525, %vm989
      %vm1826 = vmand %vm1526, %vm990
      %v1827 = vsel %vm1819, 1, 0
      %v1828 = vsel %vm1820, 1, 0
      %v1829 = vsel %vm1821, 1, 0
      %v1830 = vsel %vm1822, 1, 0
      %v1831 = vsel %vm1823, 1, 0
      %v1832 = vsel %vm1824, 1, 0
      %v1833 = vsel %vm1825, 1, 0
      %v1834 = vsel %vm1826, 1, 0
      %1835 = vset.pattern.permute.xlu0 0
      %1836 = vperm.xlu0 %1835, %v1827
      %v1837 = vpop.permute.xlu0 %1836
      %1838 = vset.pattern.permute.xlu0 0
      %1839 = vperm.xlu0 %1838, %v1828
      %v1840 = vpop.permute.xlu0 %1839
      %1841 = vset.pattern.permute.xlu0 0
      %1842 = vperm.xlu0 %1841, %v1829
      %v1843 = vpop.permute.xlu0 %1842
      %1844 = vset.pattern.permute.xlu0 0
      %1845 = vperm.xlu0 %1844, %v1830
      %v1846 = vpop.permute.xlu0 %1845
      %1847 = vset.pattern.permute.xlu0 0
      %1848 = vperm.xlu0 %1847, %v1831
      %v1849 = vpop.permute.xlu0 %1848
      %1850 = vset.pattern.permute.xlu0 0
      %1851 = vperm.xlu0 %1850, %v1832
      %v1852 = vpop.permute.xlu0 %1851
      %1853 = vset.pattern.permute.xlu0 0
      %1854 = vperm.xlu0 %1853, %v1833
      %v1855 = vpop.permute.xlu0 %1854
      %1856 = vset.pattern.permute.xlu0 0
      %1857 = vperm.xlu0 %1856, %v1834
      %v1858 = vpop.permute.xlu0 %1857
      %vm1859 = vcmp.eq.s32.totalorder %v1837, 1
      %vm1860 = vcmp.eq.s32.totalorder %v1840, 1
      %vm1861 = vcmp.eq.s32.totalorder %v1843, 1
      %vm1862 = vcmp.eq.s32.totalorder %v1846, 1
      %vm1863 = vcmp.eq.s32.totalorder %v1849, 1
      %vm1864 = vcmp.eq.s32.totalorder %v1852, 1
      %vm1865 = vcmp.eq.s32.totalorder %v1855, 1
      %vm1866 = vcmp.eq.s32.totalorder %v1858, 1
      %v1867 = vsel %vm1859, %v980, 0.0
      %v1868 = vsel %vm1860, %v979, 0.0
      %v1869 = vsel %vm1861, %v978, 0.0
      %v1870 = vsel %vm1862, %v977, 0.0
      %v1871 = vsel %vm1863, %v976, 0.0
      %v1872 = vsel %vm1864, %v975, 0.0
      %v1873 = vsel %vm1865, %v982, 0.0
      %v1874 = vsel %vm1866, %v981, 0.0
      %v1875 = vpack.c.bf16 %v1868, %v1867
      %v1876 = vpack.c.bf16 %v1870, %v1869
      %v1877 = vpack.c.bf16 %v1872, %v1871
      %v1878 = vpack.c.bf16 %v1874, %v1873
      %s1879 = scalar_lea.vmem %s7, 16
      %v1880 = vld [vmem:[%s1879] sm:$0x3]
      %v1882 = vsel %vm804, %v1875, 0
      %v1885 = vsel %vm804, %v1876, 0
      %v1888 = vsel %vm804, %v1877, 0
      %v1891 = vsel %vm804, %v1878, 0
      %v1894 = vsel %vm817, %v1880, 0
      %1896 = vmatprep.subr.bf16.mxu0 0
      %1897 = vmatpush1.bf16.msra.mxu0 %v1894
      %1898 = vmatprep.subr.bf16.mxu0 0
      %1899 = vmatpush1.bf16.msra.mxu0 0
      %1900 = vmatprep.subr.bf16.mxu0 0
      %1901 = vmatpush1.bf16.msra.mxu0 0
      %1902 = vmatprep.subr.bf16.mxu0 0
      %1903 = vmatpush1.bf16.msra.mxu0 0
      %1904 = vmatprep.subr.bf16.mxu0 0
      %1905 = vmatpush1.bf16.msra.mxu0 0
      %1906 = vmatprep.subr.bf16.mxu0 0
      %1907 = vmatpush1.bf16.msra.mxu0 0
      %1908 = vmatprep.subr.bf16.mxu0 0
      %1909 = vmatpush1.bf16.msra.mxu0 0
      %1910 = vmatprep.subr.bf16.mxu0 0
      %1911 = vmatpush1.bf16.msra.mxu0 0
      %1912 = vmatprep.subr.bf16.mxu0 0
      %1913 = vmatpush1.bf16.msra.mxu0 0
      %1914 = vmatprep.subr.bf16.mxu0 0
      %1915 = vmatpush1.bf16.msra.mxu0 0
      %1916 = vmatprep.subr.bf16.mxu0 0
      %1917 = vmatpush1.bf16.msra.mxu0 0
      %1918 = vmatprep.subr.bf16.mxu0 0
      %1919 = vmatpush1.bf16.msra.mxu0 0
      %1920 = vmatprep.subr.bf16.mxu0 0
      %1921 = vmatpush1.bf16.msra.mxu0 0
      %1922 = vmatprep.subr.bf16.mxu0 0
      %1923 = vmatpush1.bf16.msra.mxu0 0
      %1924 = vmatprep.subr.bf16.mxu0 0
      %1925 = vmatpush1.bf16.msra.mxu0 0
      %1926 = vmatprep.subr.bf16.mxu0 0
      %1927 = vmatpush1.bf16.msra.mxu0 0
      %1928 = vmatprep.mubr.bf16.mxu0 0
      %1929 = vmatmul.mubr.bf16.gmra.mrb[0].mxu0 %v1882
      %v1930 = vpop.f32.mrb[0].mxu0
      %v1931 = vadd.f32 0.0, %v1930
      %v1932 = vpop.f32.mrb[0].mxu0
      %v1933 = vpop.f32.mrb[0].mxu0
      %v1934 = vadd.f32 0.0, %v1933
      %v1935 = vpop.f32.mrb[0].mxu0
      %1936 = vmatprep.mubr.bf16.mxu0 0
      %1937 = vmatmul.mubr.bf16.gmra.mrb[0].mxu0 %v1885
      %v1938 = vpop.f32.mrb[0].mxu0
      %v1939 = vadd.f32 0.0, %v1938
      %v1940 = vpop.f32.mrb[0].mxu0
      %v1941 = vpop.f32.mrb[0].mxu0
      %v1942 = vadd.f32 0.0, %v1941
      %v1943 = vpop.f32.mrb[0].mxu0
      %1944 = vmatprep.mubr.bf16.mxu0 0
      %1945 = vmatmul.mubr.bf16.gmra.mrb[0].mxu0 %v1888
      %v1946 = vpop.f32.mrb[0].mxu0
      %v1947 = vadd.f32 0.0, %v1946
      %v1948 = vpop.f32.mrb[0].mxu0
      %v1949 = vpop.f32.mrb[0].mxu0
      %v1950 = vadd.f32 0.0, %v1949
      %v1951 = vpop.f32.mrb[0].mxu0
      %1952 = vmatprep.mubr.bf16.mxu0 0
      %1953 = vmatmul.mubr.bf16.gmra.mrb[0].mxu0 %v1891
      %v1954 = vpop.f32.mrb[0].mxu0
      %v1955 = vadd.f32 0.0, %v1954
      %v1956 = vpop.f32.mrb[0].mxu0
      %v1957 = vpop.f32.mrb[0].mxu0
      %v1958 = vadd.f32 0.0, %v1957
      %v1959 = vpop.f32.mrb[0].mxu0
      %1960 = vdwg.mxu0
      %v1961 = vadd.f32 %v1811, %v1931
      %v1962 = vadd.f32 %v1812, %v1934
      %v1963 = vadd.f32 %v1813, %v1939
      %v1964 = vadd.f32 %v1814, %v1942
      %v1965 = vadd.f32 %v1815, %v1947
      %v1966 = vadd.f32 %v1816, %v1950
      %v1967 = vadd.f32 %v1817, %v1955
      %v1968 = vadd.f32 %v1818, %v1958
      %v1969 = vld [vmem:[%s8] sm:$0x1]
      %v1971 = vlaneseq
      %v1972 = vshrl.u32 %v1971, 7
      %v1973 = vsub.s32 0, %v1972
      %v1974 = vrot.slane %v1969, %v1973
      %v1976 = vadd.f32 %v1961, %v1974
      %v1977 = vadd.f32 %v1962, %v1974
      %v1978 = vadd.f32 %v1963, %v1974
      %v1979 = vadd.f32 %v1964, %v1974
      %v1980 = vadd.f32 %v1965, %v1974
      %v1981 = vadd.f32 %v1966, %v1974
      %v1982 = vadd.f32 %v1967, %v1974
      %v1983 = vadd.f32 %v1968, %v1974
      %v1984 = vadd.f32 %v1976, %v512
      %v1985 = vadd.f32 %v1977, %v515
      %v1986 = vadd.f32 %v1978, %v520
      %v1987 = vadd.f32 %v1979, %v523
      %v1988 = vadd.f32 %v1980, %v528
      %v1989 = vadd.f32 %v1981, %v531
      %v1990 = vadd.f32 %v1982, %v536
      %v1991 = vadd.f32 %v1983, %v539
      %v1992 = vpack.c.bf16 %v1985, %v1984
      %v1993 = vpack.c.bf16 %v1987, %v1986
      %v1994 = vpack.c.bf16 %v1989, %v1988
      %v1995 = vpack.c.bf16 %v1991, %v1990
      %v2000 = vunpack.c.l.b16 %v1992
      %v2001 = vunpack.c.h.b16 %v1992
      %v2002 = vunpack.c.l.b16 %v1993
      %v2003 = vunpack.c.h.b16 %v1993
      %v2004 = vunpack.c.l.b16 %v1994
      %v2005 = vunpack.c.h.b16 %v1994
      %v2006 = vunpack.c.l.b16 %v1995
      %v2007 = vunpack.c.h.b16 %v1995
      %v2008 = vpack.c.b16 %v2000, %v2000
      %v2009 = vpack.c.b16 %v2001, %v2001
      %v2010 = vpack.c.b16 %v2002, %v2002
      %v2011 = vpack.c.b16 %v2003, %v2003
      %v2012 = vpack.c.b16 %v2004, %v2004
      %v2013 = vpack.c.b16 %v2005, %v2005
      %v2014 = vpack.c.b16 %v2006, %v2006
      %v2015 = vpack.c.b16 %v2007, %v2007
      %vm2024 = vcmask 60416
      %2025 = vst.msk [vmem:[%s397] sm:$0xf] %vm2024, %v2008
      %2026 = vst.msk [vmem:[%s397 + $0x4] sm:$0xf] %vm2024, %v2009
      %2027 = vst.msk [vmem:[%s397 + $0x8] sm:$0xf] %vm2024, %v2010
      %2028 = vst.msk [vmem:[%s397 + $0xc] sm:$0xf] %vm2024, %v2011
      %2029 = vst.msk [vmem:[%s397 + $0x10] sm:$0xf] %vm2024, %v2012
      %2030 = vst.msk [vmem:[%s397 + $0x14] sm:$0xf] %vm2024, %v2013
      %2031 = vst.msk [vmem:[%s397 + $0x18] sm:$0xf] %vm2024, %v2014
      %2032 = vst.msk [vmem:[%s397 + $0x1c] sm:$0xf] %vm2024, %v2015
      %vm2033 = vcmask 64512
      %v2034 = vsel %vm2033, %v1984, 0.0
      %v2035 = vsel %vm2033, %v1985, 0.0
      %v2036 = vadd.f32 %v2034, %v2035
      %v2037 = vsel %vm2033, %v1986, 0.0
      %v2038 = vadd.f32 %v2036, %v2037
      %v2039 = vsel %vm2033, %v1987, 0.0
      %v2040 = vadd.f32 %v2038, %v2039
      %v2041 = vsel %vm2033, %v1988, 0.0
      %v2042 = vadd.f32 %v2040, %v2041
      %v2043 = vsel %vm2033, %v1989, 0.0
      %v2044 = vadd.f32 %v2042, %v2043
      %v2045 = vsel %vm2033, %v1990, 0.0
      %v2046 = vadd.f32 %v2044, %v2045
      %v2047 = vsel %vm2033, %v1991, 0.0
      %v2048 = vadd.f32 %v2046, %v2047
      %v2049 = vrot.slane %v2048, 4
      %v2050 = vadd.f32 %v2048, %v2049
      %v2051 = vrot.slane %v2050, 2
      %v2052 = vadd.f32 %v2050, %v2051
      %v2053 = vrot.slane %v2052, 1
      %v2054 = vadd.f32 %v2052, %v2053
      %vm2055 = vcmask 57344
      %2056 = vst.msk [vmem:[%s400] sm:$0x1] %vm2055, %v2054
      %v2057 = vmul.f32 %v1984, %v1984
      %v2058 = vmul.f32 %v1985, %v1985
      %v2059 = vmul.f32 %v1986, %v1986
      %v2060 = vmul.f32 %v1987, %v1987
      %v2061 = vmul.f32 %v1988, %v1988
      %v2062 = vmul.f32 %v1989, %v1989
      %v2063 = vmul.f32 %v1990, %v1990
      %v2064 = vmul.f32 %v1991, %v1991
      %v2065 = vsel %vm2033, %v2057, 0.0
      %v2066 = vsel %vm2033, %v2058, 0.0
      %v2067 = vadd.f32 %v2065, %v2066
      %v2068 = vsel %vm2033, %v2059, 0.0
      %v2069 = vadd.f32 %v2067, %v2068
      %v2070 = vsel %vm2033, %v2060, 0.0
      %v2071 = vadd.f32 %v2069, %v2070
      %v2072 = vsel %vm2033, %v2061, 0.0
      %v2073 = vadd.f32 %v2071, %v2072
      %v2074 = vsel %vm2033, %v2062, 0.0
      %v2075 = vadd.f32 %v2073, %v2074
      %v2076 = vsel %vm2033, %v2063, 0.0
      %v2077 = vadd.f32 %v2075, %v2076
      %v2078 = vsel %vm2033, %v2064, 0.0
      %v2079 = vadd.f32 %v2077, %v2078
      %v2080 = vrot.slane %v2079, 4
      %v2081 = vadd.f32 %v2079, %v2080
      %v2082 = vrot.slane %v2081, 2
      %v2083 = vadd.f32 %v2081, %v2082
      %v2084 = vrot.slane %v2083, 1
      %v2085 = vadd.f32 %v2083, %v2084
      %2086 = vst.msk [vmem:[%s403] sm:$0x1] %vm2055, %v2085
      %p2087 = scmp.lt.s32.totalorder %s23, 1
      %s2088 = scalar_select %p2087, %s23, 1
      %s2089 = smul.addr %s2088, 8
      %s2090 = smul.addr %s2089, 4
      %s2091 = scalar_lea.vmem %s9, %s2090
      %p2092 = scmp.lt.s32.totalorder %s23, 1
      %s2093 = scalar_select %p2092, %s23, 1
      %s2094 = scalar_lea.vmem %s10, %s2093
      %p2095 = scmp.lt.s32.totalorder %s23, 1
      %s2096 = scalar_select %p2095, %s23, 1
      %s2097 = scalar_lea.vmem %s11, %s2096
      // Predicated region
      $region57: #{residual_cnn_forward.2} parent=55 // pred_check
        %p2098 = pneg %p235
      $region58: #{residual_cnn_forward.2} parent=55 // pred_check_branch
        %2100 = sbr.rel (%p2098) target = $region60
      $region59: #{residual_cnn_forward.2} parent=55 // pred_region
        _
      $region60: #{residual_cnn_forward.2} parent=55 // pred_fallthru
        _
      // Predicated region
      $region61: #{residual_cnn_forward.2} parent=55 // pred_check
        %p2101 = pneg %p261
      $region62: #{residual_cnn_forward.2} parent=55 // pred_check_branch
        %2103 = sbr.rel (%p2101) target = $region64
      $region63: #{residual_cnn_forward.2} parent=55 // pred_region
        _
      $region64: #{residual_cnn_forward.2} parent=55 // pred_fallthru
        _
      // Predicated region
      $region65: #{residual_cnn_forward.2} parent=55 // pred_check
        %p2104 = pneg %p287
      $region66: #{residual_cnn_forward.2} parent=55 // pred_check_branch
        %2106 = sbr.rel (%p2104) target = $region68
      $region67: #{residual_cnn_forward.2} parent=55 // pred_region
        _
      $region68: #{residual_cnn_forward.2} parent=55 // pred_fallthru
        _
    $region56: #{residual_cnn_forward.2} parent=5 // pred_fallthru
      _
    %p2107 = scmp.le.s32.totalorder 2, %s18
    // Predicated region
    $region69: #{residual_cnn_forward.2} parent=5 // pred_check
      %p2108 = pneg %p2107
    $region70: #{residual_cnn_forward.2} parent=5 // pred_check_branch
      %2110 = sbr.rel (%p2108) target = $region72
    $region71: #{residual_cnn_forward.2} parent=5 // pred_region
      %s2111 = ssub.s32 %s18, 2
      // Predicated region
      $region73: #{residual_cnn_forward.2} parent=71 // pred_check
        %p2112 = pneg %p241
      $region74: #{residual_cnn_forward.2} parent=71 // pred_check_branch
        %2114 = sbr.rel (%p2112) target = $region76
      $region75: #{residual_cnn_forward.2} parent=71 // pred_region
        %p2115 = scmp.lt.s32.totalorder %s24, 1
        %s2116 = scalar_select %p2115, %s24, 1
        %s2117 = smul.addr %s2116, 8
        %s2118 = smul.addr %s2117, 4
        %s2119 = scalar_lea.vmem %s9, %s2118
      $region76: #{residual_cnn_forward.2} parent=71 // pred_fallthru
        _
      // Predicated region
      $region77: #{residual_cnn_forward.2} parent=71 // pred_check
        %p2120 = pneg %p267
      $region78: #{residual_cnn_forward.2} parent=71 // pred_check_branch
        %2122 = sbr.rel (%p2120) target = $region80
      $region79: #{residual_cnn_forward.2} parent=71 // pred_region
        %p2123 = scmp.lt.s32.totalorder %s24, 1
        %s2124 = scalar_select %p2123, %s24, 1
        %s2125 = scalar_lea.vmem %s10, %s2124
      $region80: #{residual_cnn_forward.2} parent=71 // pred_fallthru
        _
      // Predicated region
      $region81: #{residual_cnn_forward.2} parent=71 // pred_check
        %p2126 = pneg %p293
      $region82: #{residual_cnn_forward.2} parent=71 // pred_check_branch
        %2128 = sbr.rel (%p2126) target = $region84
      $region83: #{residual_cnn_forward.2} parent=71 // pred_region
        %p2129 = scmp.lt.s32.totalorder %s24, 1
        %s2130 = scalar_select %p2129, %s24, 1
        %s2131 = scalar_lea.vmem %s11, %s2130
      $region84: #{residual_cnn_forward.2} parent=71 // pred_fallthru
        _
    $region72: #{residual_cnn_forward.2} parent=5 // pred_fallthru
      _
  $region6: #{residual_cnn_forward.2} parent=0 // loop_footer
    %s22 = sadd.s32 1, %s18
  $region7: #{residual_cnn_forward.2} parent=0 // loop_footer_branch
    %17 = sbr.rel target = $region3
  $region8: #{residual_cnn_forward.2} parent=0 // loop_exit
    _

</llo_original>
